<compile_context>
chip_gen: v5e
topology: v5e:2x2
jax: 0.10.0
libtpu: 0.0.40
codegen_flags: <defaults>
</compile_context>

<pallas_src>
import jax
import jax.numpy as jnp
from jax.experimental import pallas as pl
from jax.experimental.pallas import tpu as pltpu

# ----------------------------- model dims (small, synthetic) ----------------
B = 2            # batch
C = 3            # image channels
IMG = 16         # image H = W
PATCH = 8        # patch size  -> P = (16/8)^2 = 4 patches per image
P = (IMG // PATCH) ** 2
D_VIS = 32       # vision hidden
D_LM = 32        # language hidden
NUM_HEADS = 4
HEAD_DIM = D_LM // NUM_HEADS
D_FF = 64        # MLP hidden
S = 8            # text sequence length
VOCAB = 128
PAD_ID = 0
IGNORE = -100

BS = B * S                         # 16 flattened text rows
BP = B * P                         # 8  flattened image tokens
PATCH_FEAT = C * PATCH * PATCH     # 192
PATCH_FEAT_PAD = 256               # patch features padded (last col = bias one)

LOG2_S = S.bit_length() - 1
LOG2_P = P.bit_length() - 1
assert (1 << LOG2_S) == S and (1 << LOG2_P) == P
NEG_IN = -1e6    # in-batch masked (non-causal / pad key)
NEG_XB = -1e9    # cross-batch (strictly more negative -> no cross-batch leak)

# ----------------------------- weight-slab row layout (bf16, 128 lanes) -----
ROW_WPATCH = 0                                   # (256, 32) patch proj + folded bias row
ROW_WPROJ = ROW_WPATCH + PATCH_FEAT_PAD          # (32, 32)
ROW_ATTN_SELF = ROW_WPROJ + D_VIS                # (128, 64) [A_self | M_self]
ROW_ATTN_CROSS = ROW_ATTN_SELF + NUM_HEADS * D_LM  # (128, 64) [A_cross | M_cross]
ROW_W1 = ROW_ATTN_CROSS + NUM_HEADS * D_LM       # (32, 64)
ROW_W2 = ROW_W1 + D_LM                           # (64, 32)
ROW_WVOC = ROW_W2 + D_FF                         # (32, 128)
ROW_BPROJ = ROW_WVOC + D_LM                      # (1, 32)
WSLAB_ROWS = 688                                 # padded to multiple of 16 (bf16 tile)

# ----------------------------- activation-slab row layout (f32, 256 lanes) --
AROW_PATCH = 0            # rows 0:8   patches (8,256); lane 192 == 1.0 (bias)
AROW_META = BP            # rows 8:24  lane0 am, lane1 moff, lane2 tgt, lanes 32:64 tok
AROW_KEY = AROW_META + BS  # row 24    lanes 0:16 am as a key row
ASLAB_ROWS = 32
ASLAB_COLS = 256
TOK_LANE = 32

NT = (((1,), (1,)), ((), ()))   # contract dim 1 of both operands (q @ k^T, no transpose op)


# ----------------------------- in-kernel helpers ----------------------------
def _rms(x):
    var = jnp.mean(x * x, axis=-1, keepdims=True)
    return x * jax.lax.rsqrt(var + 1e-6)


def _softmax_rows(s):
    m = jnp.max(s, axis=-1, keepdims=True)
    e = jnp.exp(s - m)
    d = jnp.sum(e, axis=-1, keepdims=True)
    return e * pl.reciprocal(d, approx=True)


def _block_diag_replicate(a, n):
    """(r,c) -> (n*r, n*c) block-diagonal with `a` in every diagonal block."""
    r, c = a.shape
    rep = jnp.concatenate([a] * n, axis=0)
    rep = jnp.concatenate([rep] * n, axis=1)
    ri = jax.lax.broadcasted_iota(jnp.int32, rep.shape, 0)
    ci = jax.lax.broadcasted_iota(jnp.int32, rep.shape, 1)
    keep = (ri >> (r.bit_length() - 1)) == (ci >> (c.bit_length() - 1))
    return jnp.where(keep, rep, jnp.zeros_like(rep))


def _block_diag_cols(p, n):
    """(n*rb, c) -> (n*rb, n*c); row-block g keeps its values only in col-block g."""
    rows, c = p.shape
    rb = rows // n
    rep = jnp.concatenate([p] * n, axis=1)
    ri = jax.lax.broadcasted_iota(jnp.int32, rep.shape, 0)
    ci = jax.lax.broadcasted_iota(jnp.int32, rep.shape, 1)
    keep = (ri >> (rb.bit_length() - 1)) == (ci >> (c.bit_length() - 1))
    return jnp.where(keep, rep, jnp.zeros_like(rep))


# ----------------------------- fused kernel ---------------------------------
def fused_kernel(wslab_ref, aslab_ref, logits_ref, loss_ref):
    f32 = jnp.float32
    bf16 = jnp.bfloat16

    # ---- unpack weight slab (row slices, lane offset 0) ----
    w_patch = wslab_ref[ROW_WPATCH:ROW_WPATCH + PATCH_FEAT_PAD, 0:D_VIS]        # (256,32)
    w_proj = wslab_ref[ROW_WPROJ:ROW_WPROJ + D_VIS, 0:D_LM]                     # (32,32)
    w_self = wslab_ref[ROW_ATTN_SELF:ROW_ATTN_SELF + NUM_HEADS * D_LM, 0:2 * D_LM]
    w_cross = wslab_ref[ROW_ATTN_CROSS:ROW_ATTN_CROSS + NUM_HEADS * D_LM, 0:2 * D_LM]
    w1 = wslab_ref[ROW_W1:ROW_W1 + D_LM, 0:D_FF]                                # (32,64)
    w2 = wslab_ref[ROW_W2:ROW_W2 + D_FF, 0:D_LM]                                # (64,32)
    w_voc = wslab_ref[ROW_WVOC:ROW_WVOC + D_LM, 0:VOCAB]                        # (32,128)
    b_proj = wslab_ref[ROW_BPROJ:ROW_BPROJ + 1, 0:D_LM].astype(f32)             # (1,32)

    # ---- unpack activation / metadata slab ----
    px = aslab_ref[AROW_PATCH:AROW_PATCH + BP, :].astype(bf16)                  # (8,256)
    meta = aslab_ref[AROW_META:AROW_META + BS, 0:2 * D_LM]                      # (16,64) f32
    am_col = meta[:, 0:1]                                                       # (16,1)
    moff_col = meta[:, 1:2]
    tgt_col = meta[:, 2:3]
    tok = meta[:, TOK_LANE:TOK_LANE + D_LM]                                     # (16,32)
    am_row = aslab_ref[AROW_KEY:AROW_KEY + 1, 0:BS]                             # (1,16)

    # ---- vision tower + projector (patch bias folded via ones column) ----
    h = jax.nn.gelu(jnp.dot(px, w_patch, preferred_element_type=f32))           # (8,32)
    img = jnp.dot(h.astype(bf16), w_proj, preferred_element_type=f32) + b_proj  # (8,32)
    img_bf = img.astype(bf16)

    # ---- masks: static structure from iota, dynamic part from metadata ----
    r = jax.lax.broadcasted_iota(jnp.int32, (NUM_HEADS * BS, BS), 0)
    c = jax.lax.broadcasted_iota(jnp.int32, (NUM_HEADS * BS, BS), 1)
    q = r & (BS - 1)                                        # flat query idx (per head block)
    same_b = (q >> LOG2_S) == (c >> LOG2_S)
    causal = (q & (S - 1)) >= (c & (S - 1))
    key_ok = am_row == 1.0
    # two-level mask: cross-batch strictly more negative than in-batch masked.
    smask = jnp.where(same_b, jnp.where(causal & key_ok, 0.0, NEG_IN), NEG_XB)  # (64,16)

    rc = jax.lax.broadcasted_iota(jnp.int32, (NUM_HEADS * BS, BP), 0)
    cc = jax.lax.broadcasted_iota(jnp.int32, (NUM_HEADS * BS, BP), 1)
    cmask = jnp.where(((rc & (BS - 1)) >> LOG2_S) == (cc >> LOG2_P), 0.0, NEG_XB)  # (64,8)

    # hyper-attention gate (multiplicative): query at/after media offset and not padding.
    spos = jax.lax.broadcasted_iota(jnp.int32, (BS, 1), 0) & (S - 1)
    gate = ((spos.astype(f32) >= moff_col) & (am_col == 1.0)).astype(f32)       # (16,1)

    x = tok                                                                      # (16,32) f32

    # ---- masked causal self-attention: all heads in 3 MXU pushes ----
    xn = _rms(x).astype(bf16)                             # rmsnorm gain folded into weights
    xn_bd = _block_diag_replicate(xn, NUM_HEADS)          # (64,128)
    qu = jnp.dot(xn_bd, w_self, preferred_element_type=f32)                     # (64,64)
    qs = qu[:, 0:D_LM].astype(bf16)                       # per-head q = xn @ (Wq Wk^T), scaled
    us = qu[:, D_LM:2 * D_LM].astype(bf16)                # per-head u = xn @ (Wv Wo)
    s = jax.lax.dot_general(qs, xn, NT, preferred_element_type=f32) + smask     # (64,16)
    p = _softmax_rows(s)
    p_bd = _block_diag_cols(p.astype(bf16), NUM_HEADS)                           # (64,64)
    aos = jnp.dot(p_bd, us, preferred_element_type=f32)                          # (64,32)
    x = x + (aos[0:BS] + aos[BS:2 * BS] + aos[2 * BS:3 * BS] + aos[3 * BS:4 * BS])

    # ---- media-offset-gated cross ("hyper") attention over image tokens ----
    # TODO(synk): cross attention re-uses the self-attention query projection,
    # matching the synthetic reference; real mPLUG-Owl3 weights are not loaded.
    xn2 = _rms(x).astype(bf16)
    lhs = jnp.concatenate([_block_diag_replicate(xn2, NUM_HEADS),
                           _block_diag_replicate(img_bf, NUM_HEADS)], axis=0)    # (96,128)
    quc = jnp.dot(lhs, w_cross, preferred_element_type=f32)                       # (96,64)
    qc = quc[0:NUM_HEADS * BS, 0:D_LM].astype(bf16)                               # (64,32)
    uc = quc[NUM_HEADS * BS:, D_LM:2 * D_LM].astype(bf16)                         # (32,32)
    sc = jax.lax.dot_general(qc, img_bf, NT, preferred_element_type=f32) + cmask  # (64,8)
    pc = _softmax_rows(sc)
    pc_bd = _block_diag_cols(pc.astype(bf16), NUM_HEADS)                          # (64,32)
    aoc = jnp.dot(pc_bd, uc, preferred_element_type=f32)                          # (64,32)
    cross = aoc[0:BS] + aoc[BS:2 * BS] + aoc[2 * BS:3 * BS] + aoc[3 * BS:4 * BS]
    x = x + cross * gate

    # ---- MLP ----
    xn3 = _rms(x).astype(bf16)
    ff = jax.nn.gelu(jnp.dot(xn3, w1, preferred_element_type=f32))                # (16,64)
    x = x + jnp.dot(ff.astype(bf16), w2, preferred_element_type=f32)

    # ---- LM head (lane-dense (16,128) output) ----
    xn4 = _rms(x).astype(bf16)
    logits = jnp.dot(xn4, w_voc, preferred_element_type=f32)                      # (16,128)
    logits_ref[...] = logits

    # ---- cross-entropy epilogue (reduced in-kernel) ----
    valid = tgt_col != float(IGNORE)
    tgt_i = jnp.where(valid, tgt_col, 0.0).astype(jnp.int32)                      # (16,1)
    m = jnp.max(logits, axis=-1, keepdims=True)
    lse = m + jnp.log(jnp.sum(jnp.exp(logits - m), axis=-1, keepdims=True))
    col = jax.lax.broadcasted_iota(jnp.int32, (BS, VOCAB), 1)
    picked = jnp.sum(jnp.where(col == tgt_i, logits, 0.0), axis=-1, keepdims=True)
    validf = valid.astype(f32)
    per_tok = (lse - picked) * validf
    total = jnp.sum(per_tok, axis=0, keepdims=True)                               # (1,1)
    count = jnp.sum(validf, axis=0, keepdims=True)                                # (1,1)
    loss_ref[...] = total / jnp.maximum(count, 1.0)


def _fused_call(wslab, aslab):
    vmem = pl.BlockSpec(memory_space=pltpu.MemorySpace.VMEM)
    return pl.pallas_call(
        fused_kernel,
        out_shape=(jax.ShapeDtypeStruct((BS, VOCAB), jnp.float32),
                   jax.ShapeDtypeStruct((1, 1), jnp.float32)),
        in_specs=[vmem, vmem],
        out_specs=(vmem, vmem),
        cost_estimate=pl.CostEstimate(flops=4_200_000, transcendentals=6_000,
                                      bytes_accessed=250_000),
    )(wslab, aslab)


# ----------------------------- full forward ---------------------------------
@jax.jit
def evaluator_forward(pixel_values, input_ids, attention_mask, media_offset,
                      labels, params):
    # patch extraction (conv-as-matmul rows)
    b, c, hgt, wid = pixel_values.shape
    nph, npw = hgt // PATCH, wid // PATCH
    patches = pixel_values.reshape(b, c, nph, PATCH, npw, PATCH)
    patches = patches.transpose(0, 2, 4, 1, 3, 5).reshape(b * nph * npw, PATCH_FEAT)

    # token embedding lookup (XLA gather glue; kernel consumes f32 rows)
    tok = params["embed"][input_ids].reshape(BS, D_LM).astype(jnp.float32)

    am = attention_mask.astype(jnp.float32).reshape(BS)
    moff = jnp.broadcast_to(media_offset.astype(jnp.float32)[:, None], (B, S)).reshape(BS)
    tgt = jnp.concatenate([labels[:, 1:], jnp.full((B, 1), IGNORE, labels.dtype)],
                          axis=1).astype(jnp.float32).reshape(BS)

    # one per-call activation/metadata slab (single DMA into the kernel)
    aslab = jnp.zeros((ASLAB_ROWS, ASLAB_COLS), jnp.float32)
    aslab = aslab.at[AROW_PATCH:AROW_PATCH + BP, 0:PATCH_FEAT].set(patches)
    aslab = aslab.at[AROW_PATCH:AROW_PATCH + BP, PATCH_FEAT].set(1.0)   # folded vision bias
    aslab = aslab.at[AROW_META:AROW_META + BS, 0].set(am)
    aslab = aslab.at[AROW_META:AROW_META + BS, 1].set(moff)
    aslab = aslab.at[AROW_META:AROW_META + BS, 2].set(tgt)
    aslab = aslab.at[AROW_META:AROW_META + BS, TOK_LANE:TOK_LANE + D_LM].set(tok)
    aslab = aslab.at[AROW_KEY, 0:BS].set(am)

    logits2d, loss = _fused_call(params["wslab"], aslab)
    return loss[0, 0], logits2d.reshape(B, S, VOCAB)


# ----------------------------- deterministic params -------------------------
def init_params():
    key = jax.random.PRNGKey(0)
    ks = jax.random.split(key, 16)
    n = lambda k, shp: (0.02 * jax.random.normal(k, shp)).astype(jnp.float32)

    w_patch = n(ks[0], (PATCH_FEAT, D_VIS))
    b_patch = jnp.zeros((D_VIS,), jnp.float32)
    w_proj = n(ks[1], (D_VIS, D_LM))
    b_proj = jnp.zeros((D_LM,), jnp.float32)
    embed = n(ks[2], (VOCAB, D_LM))
    wq, wk = n(ks[3], (D_LM, D_LM)), n(ks[4], (D_LM, D_LM))
    wv, wo = n(ks[5], (D_LM, D_LM)), n(ks[6], (D_LM, D_LM))
    wkc, wvc, woc = (n(ks[7], (D_LM, D_LM)), n(ks[8], (D_LM, D_LM)),
                     n(ks[9], (D_LM, D_LM)))
    w1, w2 = n(ks[10], (D_LM, D_FF)), n(ks[11], (D_FF, D_LM))
    w_vocab = n(ks[12], (D_LM, VOCAB))
    gains = jnp.ones((4, D_LM), jnp.float32)

    def cols(w):   # (D, H*hd) -> (H, D, hd)
        return jnp.stack(
            [w[:, h * HEAD_DIM:(h + 1) * HEAD_DIM] for h in range(NUM_HEADS)], 0)

    def rows(w):   # (H*hd, D) -> (H, hd, D)
        return jnp.stack(
            [w[h * HEAD_DIM:(h + 1) * HEAD_DIM, :] for h in range(NUM_HEADS)], 0)

    qh, kh, vh, oh = cols(wq), cols(wk), cols(wv), rows(wo)
    kch, vch, och = cols(wkc), cols(wvc), rows(woc)
    scale = 1.0 / (HEAD_DIM ** 0.5)
    g0, g1, g2, g3 = gains[0], gains[1], gains[2], gains[3]

    # pre-fold per-head projections into full-width matrices; also fold the
    # softmax scale and the rmsnorm gains of the consuming layers.
    a_self = jnp.einsum('hdf,hef->hde', qh, kh) * scale
    a_self = a_self * g0[None, :, None] * g0[None, None, :]
    m_self = jnp.einsum('hdf,hfe->hde', vh, oh) * g0[None, :, None]
    a_cross = jnp.einsum('hdf,hef->hde', qh, kch) * scale * g1[None, :, None]
    m_cross = jnp.einsum('hdf,hfe->hde', vch, och)
    w_self = jnp.concatenate([a_self.reshape(NUM_HEADS * D_LM, D_LM),
                              m_self.reshape(NUM_HEADS * D_LM, D_LM)], axis=1)
    w_cross = jnp.concatenate([a_cross.reshape(NUM_HEADS * D_LM, D_LM),
                               m_cross.reshape(NUM_HEADS * D_LM, D_LM)], axis=1)
    w1f = w1 * g2[:, None]
    w_vocf = w_vocab * g3[:, None]

    # vision patch projection with the bias folded into the ones-column row
    w_patch_aug = jnp.zeros((PATCH_FEAT_PAD, D_VIS), jnp.float32)
    w_patch_aug = w_patch_aug.at[:PATCH_FEAT].set(w_patch)
    w_patch_aug = w_patch_aug.at[PATCH_FEAT].set(b_patch)

    # one static, lane-dense bf16 weight slab (single DMA into the kernel)
    wslab = jnp.zeros((WSLAB_ROWS, 128), jnp.float32)
    wslab = wslab.at[ROW_WPATCH:ROW_WPATCH + PATCH_FEAT_PAD, 0:D_VIS].set(w_patch_aug)
    wslab = wslab.at[ROW_WPROJ:ROW_WPROJ + D_VIS, 0:D_LM].set(w_proj)
    wslab = wslab.at[ROW_ATTN_SELF:ROW_ATTN_SELF + NUM_HEADS * D_LM, 0:2 * D_LM].set(w_self)
    wslab = wslab.at[ROW_ATTN_CROSS:ROW_ATTN_CROSS + NUM_HEADS * D_LM, 0:2 * D_LM].set(w_cross)
    wslab = wslab.at[ROW_W1:ROW_W1 + D_LM, 0:D_FF].set(w1f)
    wslab = wslab.at[ROW_W2:ROW_W2 + D_FF, 0:D_LM].set(w2)
    wslab = wslab.at[ROW_WVOC:ROW_WVOC + D_LM, 0:VOCAB].set(w_vocf)
    wslab = wslab.at[ROW_BPROJ, 0:D_LM].set(b_proj)
    wslab = wslab.astype(jnp.bfloat16)

    return {"embed": embed.astype(jnp.bfloat16), "wslab": wslab}


# ----------------------------- main ------------------------------------------
if __name__ == "__main__":
    # TODO(synk): HF tokenizer/processor text pipeline and pretrained-weight
    # loading have no Pallas equivalent; inputs below stand in for its output.
    params = init_params()
    key = jax.random.PRNGKey(0)
    k_img, k_ids = jax.random.split(key)

    pixel_values = jax.random.normal(k_img, (B, C, IMG, IMG), jnp.float32)

    # left-padded token batch (processor pads on the left); batch 1 has 2 pads
    attention_mask = jnp.array([[1] * S, [0, 0] + [1] * (S - 2)], jnp.int32)
    input_ids = jax.random.randint(k_ids, (B, S), 1, VOCAB).astype(jnp.int32)
    input_ids = jnp.where(attention_mask == 1, input_ids, PAD_ID)
    media_offset = jnp.array([0, 2], jnp.int32)   # first real token is <|image|>
    labels = jnp.where(attention_mask == 1, input_ids, IGNORE)

    loss, logits = evaluator_forward(pixel_values, input_ids, attention_mask,
                                     media_offset, labels, params)
    jax.block_until_ready((loss, logits))
    assert logits.shape == (B, S, VOCAB)
    assert jnp.isfinite(loss)
    print("KERNEL_OK")
</pallas_src>

<mosaic_0001>
module attributes {stable_mosaic.version = 11 : i64} {
  func.func @fused_kernel(%arg0: memref<688x128xbf16, #tpu.memory_space<vmem>>, %arg1: memref<32x256xf32, #tpu.memory_space<vmem>>, %arg2: memref<16x128xf32, #tpu.memory_space<vmem>>, %arg3: memref<1x1xf32, #tpu.memory_space<vmem>>) attributes {dimension_semantics = [], scalar_prefetch = 0 : i64, scratch_operands = 0 : i64, tpu.core_type = #tpu.core_type<tc>} {
    %c0 = arith.constant 0 : index
    %c0_0 = arith.constant 0 : index
    %0 = vector.load %arg0[%c0, %c0_0] : memref<688x128xbf16, #tpu.memory_space<vmem>>, vector<256x32xbf16>
    %c256 = arith.constant 256 : index
    %c0_1 = arith.constant 0 : index
    %1 = vector.load %arg0[%c256, %c0_1] : memref<688x128xbf16, #tpu.memory_space<vmem>>, vector<32x32xbf16>
    %c288 = arith.constant 288 : index
    %c0_2 = arith.constant 0 : index
    %2 = vector.load %arg0[%c288, %c0_2] : memref<688x128xbf16, #tpu.memory_space<vmem>>, vector<128x64xbf16>
    %c416 = arith.constant 416 : index
    %c0_3 = arith.constant 0 : index
    %3 = vector.load %arg0[%c416, %c0_3] : memref<688x128xbf16, #tpu.memory_space<vmem>>, vector<128x64xbf16>
    %c544 = arith.constant 544 : index
    %c0_4 = arith.constant 0 : index
    %4 = vector.load %arg0[%c544, %c0_4] : memref<688x128xbf16, #tpu.memory_space<vmem>>, vector<32x64xbf16>
    %c576 = arith.constant 576 : index
    %c0_5 = arith.constant 0 : index
    %5 = vector.load %arg0[%c576, %c0_5] : memref<688x128xbf16, #tpu.memory_space<vmem>>, vector<64x32xbf16>
    %c640 = arith.constant 640 : index
    %c0_6 = arith.constant 0 : index
    %6 = vector.load %arg0[%c640, %c0_6] : memref<688x128xbf16, #tpu.memory_space<vmem>>, vector<32x128xbf16>
    %c672 = arith.constant 672 : index
    %c0_7 = arith.constant 0 : index
    %7 = vector.load %arg0[%c672, %c0_7] : memref<688x128xbf16, #tpu.memory_space<vmem>>, vector<1x32xbf16>
    %8 = arith.extf %7 : vector<1x32xbf16> to vector<1x32xf32>
    %c0_8 = arith.constant 0 : index
    %c0_9 = arith.constant 0 : index
    %9 = vector.load %arg1[%c0_8, %c0_9] : memref<32x256xf32, #tpu.memory_space<vmem>>, vector<8x256xf32>
    %10 = arith.truncf %9 : vector<8x256xf32> to vector<8x256xbf16>
    %c8 = arith.constant 8 : index
    %c0_10 = arith.constant 0 : index
    %11 = vector.load %arg1[%c8, %c0_10] : memref<32x256xf32, #tpu.memory_space<vmem>>, vector<16x64xf32>
    %12 = vector.extract_strided_slice %11 {offsets = [0, 0], sizes = [16, 1], strides = [1, 1]} : vector<16x64xf32> to vector<16x1xf32>
    %13 = vector.extract_strided_slice %11 {offsets = [0, 1], sizes = [16, 1], strides = [1, 1]} : vector<16x64xf32> to vector<16x1xf32>
    %14 = vector.extract_strided_slice %11 {offsets = [0, 2], sizes = [16, 1], strides = [1, 1]} : vector<16x64xf32> to vector<16x1xf32>
    %15 = vector.extract_strided_slice %11 {offsets = [0, 32], sizes = [16, 32], strides = [1, 1]} : vector<16x64xf32> to vector<16x32xf32>
    %c24 = arith.constant 24 : index
    %c0_11 = arith.constant 0 : index
    %16 = vector.load %arg1[%c24, %c0_11] : memref<32x256xf32, #tpu.memory_space<vmem>>, vector<1x16xf32>
    %cst = arith.constant dense<0.000000e+00> : vector<8x32xf32>
    %17 = tpu.matmul %10, %0, %cst {dimension_numbers = #tpu.dot_dimension_numbers<[1], [0], [0], [1], [0, 0, 1, 1], [], []>} : vector<8x256xbf16>, vector<256x32xbf16>, vector<8x32xf32> -> vector<8x32xf32>
    %18 = arith.mulf %17, %17 : vector<8x32xf32>
    %19 = arith.mulf %17, %18 : vector<8x32xf32>
    %cst_12 = arith.constant 4.471500e-02 : f32
    %20 = vector.broadcast %cst_12 : f32 to vector<8x32xf32>
    %21 = arith.mulf %20, %19 : vector<8x32xf32>
    %22 = arith.addf %17, %21 : vector<8x32xf32>
    %cst_13 = arith.constant 0.797884583 : f32
    %23 = vector.broadcast %cst_13 : f32 to vector<8x32xf32>
    %24 = arith.mulf %23, %22 : vector<8x32xf32>
    %25 = math.tanh %24 : vector<8x32xf32>
    %cst_14 = arith.constant 1.000000e+00 : f32
    %26 = vector.broadcast %cst_14 : f32 to vector<8x32xf32>
    %27 = arith.addf %26, %25 : vector<8x32xf32>
    %cst_15 = arith.constant 5.000000e-01 : f32
    %28 = vector.broadcast %cst_15 : f32 to vector<8x32xf32>
    %29 = arith.mulf %28, %27 : vector<8x32xf32>
    %30 = arith.mulf %17, %29 : vector<8x32xf32>
    %31 = arith.truncf %30 : vector<8x32xf32> to vector<8x32xbf16>
    %cst_16 = arith.constant dense<0.000000e+00> : vector<8x32xf32>
    %32 = tpu.matmul %31, %1, %cst_16 {dimension_numbers = #tpu.dot_dimension_numbers<[1], [0], [0], [1], [0, 0, 1, 1], [], []>} : vector<8x32xbf16>, vector<32x32xbf16>, vector<8x32xf32> -> vector<8x32xf32>
    %33 = vector.broadcast %8 : vector<1x32xf32> to vector<8x32xf32>
    %34 = arith.addf %32, %33 : vector<8x32xf32>
    %35 = arith.truncf %34 : vector<8x32xf32> to vector<8x32xbf16>
    %36 = tpu.iota {dimensions = array<i32: 0>} : vector<64x16xi32>
    %37 = tpu.iota {dimensions = array<i32: 1>} : vector<64x16xi32>
    %c15_i32 = arith.constant 15 : i32
    %38 = vector.broadcast %c15_i32 : i32 to vector<64x16xi32>
    %39 = arith.andi %36, %38 : vector<64x16xi32>
    %c3_i32 = arith.constant 3 : i32
    %40 = vector.broadcast %c3_i32 : i32 to vector<64x16xi32>
    %41 = arith.shrsi %39, %40 : vector<64x16xi32>
    %c3_i32_17 = arith.constant 3 : i32
    %42 = vector.broadcast %c3_i32_17 : i32 to vector<64x16xi32>
    %43 = arith.shrsi %37, %42 : vector<64x16xi32>
    %44 = arith.cmpi eq, %41, %43 : vector<64x16xi32>
    %c7_i32 = arith.constant 7 : i32
    %45 = vector.broadcast %c7_i32 : i32 to vector<64x16xi32>
    %46 = arith.andi %39, %45 : vector<64x16xi32>
    %c7_i32_18 = arith.constant 7 : i32
    %47 = vector.broadcast %c7_i32_18 : i32 to vector<64x16xi32>
    %48 = arith.andi %37, %47 : vector<64x16xi32>
    %49 = arith.cmpi sge, %46, %48 : vector<64x16xi32>
    %cst_19 = arith.constant 1.000000e+00 : f32
    %50 = vector.broadcast %cst_19 : f32 to vector<1x16xf32>
    %51 = arith.cmpf oeq, %16, %50 : vector<1x16xf32>
    %52 = vector.broadcast %51 : vector<1x16xi1> to vector<64x16xi1>
    %53 = arith.andi %49, %52 : vector<64x16xi1>
    %cst_20 = arith.constant 0.000000e+00 : f32
    %cst_21 = arith.constant -1.000000e+06 : f32
    %54 = vector.broadcast %cst_20 : f32 to vector<64x16xf32>
    %55 = vector.broadcast %cst_21 : f32 to vector<64x16xf32>
    %56 = arith.select %53, %54, %55 : vector<64x16xi1>, vector<64x16xf32>
    %cst_22 = arith.constant -1.000000e+09 : f32
    %57 = vector.broadcast %cst_22 : f32 to vector<64x16xf32>
    %58 = arith.select %44, %56, %57 : vector<64x16xi1>, vector<64x16xf32>
    %59 = tpu.iota {dimensions = array<i32: 0>} : vector<64x8xi32>
    %60 = tpu.iota {dimensions = array<i32: 1>} : vector<64x8xi32>
    %c15_i32_23 = arith.constant 15 : i32
    %61 = vector.broadcast %c15_i32_23 : i32 to vector<64x8xi32>
    %62 = arith.andi %59, %61 : vector<64x8xi32>
    %c3_i32_24 = arith.constant 3 : i32
    %63 = vector.broadcast %c3_i32_24 : i32 to vector<64x8xi32>
    %64 = arith.shrsi %62, %63 : vector<64x8xi32>
    %c2_i32 = arith.constant 2 : i32
    %65 = vector.broadcast %c2_i32 : i32 to vector<64x8xi32>
    %66 = arith.shrsi %60, %65 : vector<64x8xi32>
    %67 = arith.cmpi eq, %64, %66 : vector<64x8xi32>
    %cst_25 = arith.constant 0.000000e+00 : f32
    %cst_26 = arith.constant -1.000000e+09 : f32
    %68 = vector.broadcast %cst_25 : f32 to vector<64x8xf32>
    %69 = vector.broadcast %cst_26 : f32 to vector<64x8xf32>
    %70 = arith.select %67, %68, %69 : vector<64x8xi1>, vector<64x8xf32>
    %71 = tpu.iota {dimensions = array<i32: 0>} : vector<16x1xi32>
    %c7_i32_27 = arith.constant 7 : i32
    %72 = vector.broadcast %c7_i32_27 : i32 to vector<16x1xi32>
    %73 = arith.andi %71, %72 : vector<16x1xi32>
    %74 = arith.sitofp %73 : vector<16x1xi32> to vector<16x1xf32>
    %75 = arith.cmpf oge, %74, %13 : vector<16x1xf32>
    %cst_28 = arith.constant 1.000000e+00 : f32
    %76 = vector.broadcast %cst_28 : f32 to vector<16x1xf32>
    %77 = arith.cmpf oeq, %12, %76 : vector<16x1xf32>
    %78 = arith.andi %75, %77 : vector<16x1xi1>
    %79 = arith.extui %78 : vector<16x1xi1> to vector<16x1xi32>
    %80 = arith.sitofp %79 : vector<16x1xi32> to vector<16x1xf32>
    %81 = arith.mulf %15, %15 : vector<16x32xf32>
    %cst_29 = arith.constant dense<0.000000e+00> : vector<16xf32>
    %82 = vector.multi_reduction <add>, %81, %cst_29 [1] : vector<16x32xf32> to vector<16xf32>
    %83 = vector.shape_cast %82 : vector<16xf32> to vector<16x1xf32>
    %cst_30 = arith.constant 3.200000e+01 : f32
    %84 = vector.broadcast %cst_30 : f32 to vector<16x1xf32>
    %85 = arith.divf %83, %84 : vector<16x1xf32>
    %cst_31 = arith.constant 9.99999997E-7 : f32
    %86 = vector.broadcast %cst_31 : f32 to vector<16x1xf32>
    %87 = arith.addf %85, %86 : vector<16x1xf32>
    %88 = math.rsqrt %87 : vector<16x1xf32>
    %89 = vector.broadcast %88 : vector<16x1xf32> to vector<16x32xf32>
    %90 = arith.mulf %15, %89 : vector<16x32xf32>
    %91 = arith.truncf %90 : vector<16x32xf32> to vector<16x32xbf16>
    %92 = tpu.concatenate %91, %91, %91, %91 in 0 : vector<16x32xbf16>, vector<16x32xbf16>, vector<16x32xbf16>, vector<16x32xbf16> -> vector<64x32xbf16>
    %93 = tpu.concatenate %92, %92, %92, %92 in 1 : vector<64x32xbf16>, vector<64x32xbf16>, vector<64x32xbf16>, vector<64x32xbf16> -> vector<64x128xbf16>
    %94 = tpu.iota {dimensions = array<i32: 0>} : vector<64x128xi32>
    %95 = tpu.iota {dimensions = array<i32: 1>} : vector<64x128xi32>
    %c4_i32 = arith.constant 4 : i32
    %96 = vector.broadcast %c4_i32 : i32 to vector<64x128xi32>
    %97 = arith.shrsi %94, %96 : vector<64x128xi32>
    %c5_i32 = arith.constant 5 : i32
    %98 = vector.broadcast %c5_i32 : i32 to vector<64x128xi32>
    %99 = arith.shrsi %95, %98 : vector<64x128xi32>
    %100 = arith.cmpi eq, %97, %99 : vector<64x128xi32>
    %cst_32 = arith.constant 0.000000e+00 : bf16
    %101 = vector.broadcast %cst_32 : bf16 to vector<64x128xbf16>
    %102 = arith.select %100, %93, %101 : vector<64x128xi1>, vector<64x128xbf16>
    %cst_33 = arith.constant dense<0.000000e+00> : vector<64x64xf32>
    %103 = tpu.matmul %102, %2, %cst_33 {dimension_numbers = #tpu.dot_dimension_numbers<[1], [0], [0], [1], [0, 0, 1, 1], [], []>} : vector<64x128xbf16>, vector<128x64xbf16>, vector<64x64xf32> -> vector<64x64xf32>
    %104 = vector.extract_strided_slice %103 {offsets = [0, 0], sizes = [64, 32], strides = [1, 1]} : vector<64x64xf32> to vector<64x32xf32>
    %105 = arith.truncf %104 : vector<64x32xf32> to vector<64x32xbf16>
    %106 = vector.extract_strided_slice %103 {offsets = [0, 32], sizes = [64, 32], strides = [1, 1]} : vector<64x64xf32> to vector<64x32xf32>
    %107 = arith.truncf %106 : vector<64x32xf32> to vector<64x32xbf16>
    %cst_34 = arith.constant dense<0.000000e+00> : vector<64x16xf32>
    %108 = tpu.matmul %105, %91, %cst_34 {dimension_numbers = #tpu.dot_dimension_numbers<[1], [1], [0], [0], [0, 0, 1, 0], [], []>} : vector<64x32xbf16>, vector<16x32xbf16>, vector<64x16xf32> -> vector<64x16xf32>
    %109 = arith.addf %108, %58 : vector<64x16xf32>
    %cst_35 = arith.constant dense<0xFF800000> : vector<64xf32>
    %110 = vector.multi_reduction <maximumf>, %109, %cst_35 [1] : vector<64x16xf32> to vector<64xf32>
    %111 = vector.shape_cast %110 : vector<64xf32> to vector<64x1xf32>
    %112 = vector.broadcast %111 : vector<64x1xf32> to vector<64x16xf32>
    %113 = arith.subf %109, %112 : vector<64x16xf32>
    %114 = math.exp %113 : vector<64x16xf32>
    %cst_36 = arith.constant dense<0.000000e+00> : vector<64xf32>
    %115 = vector.multi_reduction <add>, %114, %cst_36 [1] : vector<64x16xf32> to vector<64xf32>
    %116 = vector.shape_cast %115 : vector<64xf32> to vector<64x1xf32>
    %117 = tpu.reciprocal %116 {approx = true} : vector<64x1xf32> -> vector<64x1xf32>
    %118 = vector.broadcast %117 : vector<64x1xf32> to vector<64x16xf32>
    %119 = arith.mulf %114, %118 : vector<64x16xf32>
    %120 = arith.truncf %119 : vector<64x16xf32> to vector<64x16xbf16>
    %121 = tpu.concatenate %120, %120, %120, %120 in 1 : vector<64x16xbf16>, vector<64x16xbf16>, vector<64x16xbf16>, vector<64x16xbf16> -> vector<64x64xbf16>
    %122 = tpu.iota {dimensions = array<i32: 0>} : vector<64x64xi32>
    %123 = tpu.iota {dimensions = array<i32: 1>} : vector<64x64xi32>
    %c4_i32_37 = arith.constant 4 : i32
    %124 = vector.broadcast %c4_i32_37 : i32 to vector<64x64xi32>
    %125 = arith.shrsi %122, %124 : vector<64x64xi32>
    %c4_i32_38 = arith.constant 4 : i32
    %126 = vector.broadcast %c4_i32_38 : i32 to vector<64x64xi32>
    %127 = arith.shrsi %123, %126 : vector<64x64xi32>
    %128 = arith.cmpi eq, %125, %127 : vector<64x64xi32>
    %cst_39 = arith.constant 0.000000e+00 : bf16
    %129 = vector.broadcast %cst_39 : bf16 to vector<64x64xbf16>
    %130 = arith.select %128, %121, %129 : vector<64x64xi1>, vector<64x64xbf16>
    %cst_40 = arith.constant dense<0.000000e+00> : vector<64x32xf32>
    %131 = tpu.matmul %130, %107, %cst_40 {dimension_numbers = #tpu.dot_dimension_numbers<[1], [0], [0], [1], [0, 0, 1, 1], [], []>} : vector<64x64xbf16>, vector<64x32xbf16>, vector<64x32xf32> -> vector<64x32xf32>
    %132 = vector.extract_strided_slice %131 {offsets = [0, 0], sizes = [16, 32], strides = [1, 1]} : vector<64x32xf32> to vector<16x32xf32>
    %133 = vector.extract_strided_slice %131 {offsets = [16, 0], sizes = [16, 32], strides = [1, 1]} : vector<64x32xf32> to vector<16x32xf32>
    %134 = arith.addf %132, %133 : vector<16x32xf32>
    %135 = vector.extract_strided_slice %131 {offsets = [32, 0], sizes = [16, 32], strides = [1, 1]} : vector<64x32xf32> to vector<16x32xf32>
    %136 = arith.addf %134, %135 : vector<16x32xf32>
    %137 = vector.extract_strided_slice %131 {offsets = [48, 0], sizes = [16, 32], strides = [1, 1]} : vector<64x32xf32> to vector<16x32xf32>
    %138 = arith.addf %136, %137 : vector<16x32xf32>
    %139 = arith.addf %15, %138 : vector<16x32xf32>
    %140 = arith.mulf %139, %139 : vector<16x32xf32>
    %cst_41 = arith.constant dense<0.000000e+00> : vector<16xf32>
    %141 = vector.multi_reduction <add>, %140, %cst_41 [1] : vector<16x32xf32> to vector<16xf32>
    %142 = vector.shape_cast %141 : vector<16xf32> to vector<16x1xf32>
    %cst_42 = arith.constant 3.200000e+01 : f32
    %143 = vector.broadcast %cst_42 : f32 to vector<16x1xf32>
    %144 = arith.divf %142, %143 : vector<16x1xf32>
    %cst_43 = arith.constant 9.99999997E-7 : f32
    %145 = vector.broadcast %cst_43 : f32 to vector<16x1xf32>
    %146 = arith.addf %144, %145 : vector<16x1xf32>
    %147 = math.rsqrt %146 : vector<16x1xf32>
    %148 = vector.broadcast %147 : vector<16x1xf32> to vector<16x32xf32>
    %149 = arith.mulf %139, %148 : vector<16x32xf32>
    %150 = arith.truncf %149 : vector<16x32xf32> to vector<16x32xbf16>
    %151 = tpu.concatenate %150, %150, %150, %150 in 0 : vector<16x32xbf16>, vector<16x32xbf16>, vector<16x32xbf16>, vector<16x32xbf16> -> vector<64x32xbf16>
    %152 = tpu.concatenate %151, %151, %151, %151 in 1 : vector<64x32xbf16>, vector<64x32xbf16>, vector<64x32xbf16>, vector<64x32xbf16> -> vector<64x128xbf16>
    %153 = tpu.iota {dimensions = array<i32: 0>} : vector<64x128xi32>
    %154 = tpu.iota {dimensions = array<i32: 1>} : vector<64x128xi32>
    %c4_i32_44 = arith.constant 4 : i32
    %155 = vector.broadcast %c4_i32_44 : i32 to vector<64x128xi32>
    %156 = arith.shrsi %153, %155 : vector<64x128xi32>
    %c5_i32_45 = arith.constant 5 : i32
    %157 = vector.broadcast %c5_i32_45 : i32 to vector<64x128xi32>
    %158 = arith.shrsi %154, %157 : vector<64x128xi32>
    %159 = arith.cmpi eq, %156, %158 : vector<64x128xi32>
    %cst_46 = arith.constant 0.000000e+00 : bf16
    %160 = vector.broadcast %cst_46 : bf16 to vector<64x128xbf16>
    %161 = arith.select %159, %152, %160 : vector<64x128xi1>, vector<64x128xbf16>
    %162 = tpu.concatenate %35, %35, %35, %35 in 0 : vector<8x32xbf16>, vector<8x32xbf16>, vector<8x32xbf16>, vector<8x32xbf16> -> vector<32x32xbf16>
    %163 = tpu.concatenate %162, %162, %162, %162 in 1 : vector<32x32xbf16>, vector<32x32xbf16>, vector<32x32xbf16>, vector<32x32xbf16> -> vector<32x128xbf16>
    %164 = tpu.iota {dimensions = array<i32: 0>} : vector<32x128xi32>
    %165 = tpu.iota {dimensions = array<i32: 1>} : vector<32x128xi32>
    %c3_i32_47 = arith.constant 3 : i32
    %166 = vector.broadcast %c3_i32_47 : i32 to vector<32x128xi32>
    %167 = arith.shrsi %164, %166 : vector<32x128xi32>
    %c5_i32_48 = arith.constant 5 : i32
    %168 = vector.broadcast %c5_i32_48 : i32 to vector<32x128xi32>
    %169 = arith.shrsi %165, %168 : vector<32x128xi32>
    %170 = arith.cmpi eq, %167, %169 : vector<32x128xi32>
    %cst_49 = arith.constant 0.000000e+00 : bf16
    %171 = vector.broadcast %cst_49 : bf16 to vector<32x128xbf16>
    %172 = arith.select %170, %163, %171 : vector<32x128xi1>, vector<32x128xbf16>
    %173 = tpu.concatenate %161, %172 in 0 : vector<64x128xbf16>, vector<32x128xbf16> -> vector<96x128xbf16>
    %cst_50 = arith.constant dense<0.000000e+00> : vector<96x64xf32>
    %174 = tpu.matmul %173, %3, %cst_50 {dimension_numbers = #tpu.dot_dimension_numbers<[1], [0], [0], [1], [0, 0, 1, 1], [], []>} : vector<96x128xbf16>, vector<128x64xbf16>, vector<96x64xf32> -> vector<96x64xf32>
    %175 = vector.extract_strided_slice %174 {offsets = [0, 0], sizes = [64, 32], strides = [1, 1]} : vector<96x64xf32> to vector<64x32xf32>
    %176 = arith.truncf %175 : vector<64x32xf32> to vector<64x32xbf16>
    %177 = vector.extract_strided_slice %174 {offsets = [64, 32], sizes = [32, 32], strides = [1, 1]} : vector<96x64xf32> to vector<32x32xf32>
    %178 = arith.truncf %177 : vector<32x32xf32> to vector<32x32xbf16>
    %cst_51 = arith.constant dense<0.000000e+00> : vector<64x8xf32>
    %179 = tpu.matmul %176, %35, %cst_51 {dimension_numbers = #tpu.dot_dimension_numbers<[1], [1], [0], [0], [0, 0, 1, 0], [], []>} : vector<64x32xbf16>, vector<8x32xbf16>, vector<64x8xf32> -> vector<64x8xf32>
    %180 = arith.addf %179, %70 : vector<64x8xf32>
    %cst_52 = arith.constant dense<0xFF800000> : vector<64xf32>
    %181 = vector.multi_reduction <maximumf>, %180, %cst_52 [1] : vector<64x8xf32> to vector<64xf32>
    %182 = vector.shape_cast %181 : vector<64xf32> to vector<64x1xf32>
    %183 = vector.broadcast %182 : vector<64x1xf32> to vector<64x8xf32>
    %184 = arith.subf %180, %183 : vector<64x8xf32>
    %185 = math.exp %184 : vector<64x8xf32>
    %cst_53 = arith.constant dense<0.000000e+00> : vector<64xf32>
    %186 = vector.multi_reduction <add>, %185, %cst_53 [1] : vector<64x8xf32> to vector<64xf32>
    %187 = vector.shape_cast %186 : vector<64xf32> to vector<64x1xf32>
    %188 = tpu.reciprocal %187 {approx = true} : vector<64x1xf32> -> vector<64x1xf32>
    %189 = vector.broadcast %188 : vector<64x1xf32> to vector<64x8xf32>
    %190 = arith.mulf %185, %189 : vector<64x8xf32>
    %191 = arith.truncf %190 : vector<64x8xf32> to vector<64x8xbf16>
    %192 = tpu.concatenate %191, %191, %191, %191 in 1 : vector<64x8xbf16>, vector<64x8xbf16>, vector<64x8xbf16>, vector<64x8xbf16> -> vector<64x32xbf16>
    %193 = tpu.iota {dimensions = array<i32: 0>} : vector<64x32xi32>
    %194 = tpu.iota {dimensions = array<i32: 1>} : vector<64x32xi32>
    %c4_i32_54 = arith.constant 4 : i32
    %195 = vector.broadcast %c4_i32_54 : i32 to vector<64x32xi32>
    %196 = arith.shrsi %193, %195 : vector<64x32xi32>
    %c3_i32_55 = arith.constant 3 : i32
    %197 = vector.broadcast %c3_i32_55 : i32 to vector<64x32xi32>
    %198 = arith.shrsi %194, %197 : vector<64x32xi32>
    %199 = arith.cmpi eq, %196, %198 : vector<64x32xi32>
    %cst_56 = arith.constant 0.000000e+00 : bf16
    %200 = vector.broadcast %cst_56 : bf16 to vector<64x32xbf16>
    %201 = arith.select %199, %192, %200 : vector<64x32xi1>, vector<64x32xbf16>
    %cst_57 = arith.constant dense<0.000000e+00> : vector<64x32xf32>
    %202 = tpu.matmul %201, %178, %cst_57 {dimension_numbers = #tpu.dot_dimension_numbers<[1], [0], [0], [1], [0, 0, 1, 1], [], []>} : vector<64x32xbf16>, vector<32x32xbf16>, vector<64x32xf32> -> vector<64x32xf32>
    %203 = vector.extract_strided_slice %202 {offsets = [0, 0], sizes = [16, 32], strides = [1, 1]} : vector<64x32xf32> to vector<16x32xf32>
    %204 = vector.extract_strided_slice %202 {offsets = [16, 0], sizes = [16, 32], strides = [1, 1]} : vector<64x32xf32> to vector<16x32xf32>
    %205 = arith.addf %203, %204 : vector<16x32xf32>
    %206 = vector.extract_strided_slice %202 {offsets = [32, 0], sizes = [16, 32], strides = [1, 1]} : vector<64x32xf32> to vector<16x32xf32>
    %207 = arith.addf %205, %206 : vector<16x32xf32>
    %208 = vector.extract_strided_slice %202 {offsets = [48, 0], sizes = [16, 32], strides = [1, 1]} : vector<64x32xf32> to vector<16x32xf32>
    %209 = arith.addf %207, %208 : vector<16x32xf32>
    %210 = vector.broadcast %80 : vector<16x1xf32> to vector<16x32xf32>
    %211 = arith.mulf %209, %210 : vector<16x32xf32>
    %212 = arith.addf %139, %211 : vector<16x32xf32>
    %213 = arith.mulf %212, %212 : vector<16x32xf32>
    %cst_58 = arith.constant dense<0.000000e+00> : vector<16xf32>
    %214 = vector.multi_reduction <add>, %213, %cst_58 [1] : vector<16x32xf32> to vector<16xf32>
    %215 = vector.shape_cast %214 : vector<16xf32> to vector<16x1xf32>
    %cst_59 = arith.constant 3.200000e+01 : f32
    %216 = vector.broadcast %cst_59 : f32 to vector<16x1xf32>
    %217 = arith.divf %215, %216 : vector<16x1xf32>
    %cst_60 = arith.constant 9.99999997E-7 : f32
    %218 = vector.broadcast %cst_60 : f32 to vector<16x1xf32>
    %219 = arith.addf %217, %218 : vector<16x1xf32>
    %220 = math.rsqrt %219 : vector<16x1xf32>
    %221 = vector.broadcast %220 : vector<16x1xf32> to vector<16x32xf32>
    %222 = arith.mulf %212, %221 : vector<16x32xf32>
    %223 = arith.truncf %222 : vector<16x32xf32> to vector<16x32xbf16>
    %cst_61 = arith.constant dense<0.000000e+00> : vector<16x64xf32>
    %224 = tpu.matmul %223, %4, %cst_61 {dimension_numbers = #tpu.dot_dimension_numbers<[1], [0], [0], [1], [0, 0, 1, 1], [], []>} : vector<16x32xbf16>, vector<32x64xbf16>, vector<16x64xf32> -> vector<16x64xf32>
    %225 = arith.mulf %224, %224 : vector<16x64xf32>
    %226 = arith.mulf %224, %225 : vector<16x64xf32>
    %cst_62 = arith.constant 4.471500e-02 : f32
    %227 = vector.broadcast %cst_62 : f32 to vector<16x64xf32>
    %228 = arith.mulf %227, %226 : vector<16x64xf32>
    %229 = arith.addf %224, %228 : vector<16x64xf32>
    %cst_63 = arith.constant 0.797884583 : f32
    %230 = vector.broadcast %cst_63 : f32 to vector<16x64xf32>
    %231 = arith.mulf %230, %229 : vector<16x64xf32>
    %232 = math.tanh %231 : vector<16x64xf32>
    %cst_64 = arith.constant 1.000000e+00 : f32
    %233 = vector.broadcast %cst_64 : f32 to vector<16x64xf32>
    %234 = arith.addf %233, %232 : vector<16x64xf32>
    %cst_65 = arith.constant 5.000000e-01 : f32
    %235 = vector.broadcast %cst_65 : f32 to vector<16x64xf32>
    %236 = arith.mulf %235, %234 : vector<16x64xf32>
    %237 = arith.mulf %224, %236 : vector<16x64xf32>
    %238 = arith.truncf %237 : vector<16x64xf32> to vector<16x64xbf16>
    %cst_66 = arith.constant dense<0.000000e+00> : vector<16x32xf32>
    %239 = tpu.matmul %238, %5, %cst_66 {dimension_numbers = #tpu.dot_dimension_numbers<[1], [0], [0], [1], [0, 0, 1, 1], [], []>} : vector<16x64xbf16>, vector<64x32xbf16>, vector<16x32xf32> -> vector<16x32xf32>
    %240 = arith.addf %212, %239 : vector<16x32xf32>
    %241 = arith.mulf %240, %240 : vector<16x32xf32>
    %cst_67 = arith.constant dense<0.000000e+00> : vector<16xf32>
    %242 = vector.multi_reduction <add>, %241, %cst_67 [1] : vector<16x32xf32> to vector<16xf32>
    %243 = vector.shape_cast %242 : vector<16xf32> to vector<16x1xf32>
    %cst_68 = arith.constant 3.200000e+01 : f32
    %244 = vector.broadcast %cst_68 : f32 to vector<16x1xf32>
    %245 = arith.divf %243, %244 : vector<16x1xf32>
    %cst_69 = arith.constant 9.99999997E-7 : f32
    %246 = vector.broadcast %cst_69 : f32 to vector<16x1xf32>
    %247 = arith.addf %245, %246 : vector<16x1xf32>
    %248 = math.rsqrt %247 : vector<16x1xf32>
    %249 = vector.broadcast %248 : vector<16x1xf32> to vector<16x32xf32>
    %250 = arith.mulf %240, %249 : vector<16x32xf32>
    %251 = arith.truncf %250 : vector<16x32xf32> to vector<16x32xbf16>
    %cst_70 = arith.constant dense<0.000000e+00> : vector<16x128xf32>
    %252 = tpu.matmul %251, %6, %cst_70 {dimension_numbers = #tpu.dot_dimension_numbers<[1], [0], [0], [1], [0, 0, 1, 1], [], []>} : vector<16x32xbf16>, vector<32x128xbf16>, vector<16x128xf32> -> vector<16x128xf32>
    %c0_71 = arith.constant 0 : index
    %c0_72 = arith.constant 0 : index
    %253 = vector.load %arg2[%c0_71, %c0_72] : memref<16x128xf32, #tpu.memory_space<vmem>>, vector<16x128xf32>
    tpu.vector_store %arg2[%c0_71, %c0_72], %252 {strides = array<i32>} : memref<16x128xf32, #tpu.memory_space<vmem>>, vector<16x128xf32>,
    %cst_73 = arith.constant -1.000000e+02 : f32
    %254 = vector.broadcast %cst_73 : f32 to vector<16x1xf32>
    %255 = arith.cmpf one, %14, %254 : vector<16x1xf32>
    %cst_74 = arith.constant 0.000000e+00 : f32
    %256 = vector.broadcast %cst_74 : f32 to vector<16x1xf32>
    %257 = arith.select %255, %14, %256 : vector<16x1xi1>, vector<16x1xf32>
    %258 = arith.fptosi %257 : vector<16x1xf32> to vector<16x1xi32>
    %cst_75 = arith.constant dense<0xFF800000> : vector<16xf32>
    %259 = vector.multi_reduction <maximumf>, %252, %cst_75 [1] : vector<16x128xf32> to vector<16xf32>
    %260 = vector.shape_cast %259 : vector<16xf32> to vector<16x1xf32>
    %261 = vector.broadcast %260 : vector<16x1xf32> to vector<16x128xf32>
    %262 = arith.subf %252, %261 : vector<16x128xf32>
    %263 = math.exp %262 : vector<16x128xf32>
    %cst_76 = arith.constant dense<0.000000e+00> : vector<16xf32>
    %264 = vector.multi_reduction <add>, %263, %cst_76 [1] : vector<16x128xf32> to vector<16xf32>
    %265 = vector.shape_cast %264 : vector<16xf32> to vector<16x1xf32>
    %266 = math.log %265 : vector<16x1xf32>
    %267 = arith.addf %260, %266 : vector<16x1xf32>
    %268 = tpu.iota {dimensions = array<i32: 1>} : vector<16x128xi32>
    %269 = vector.broadcast %258 : vector<16x1xi32> to vector<16x128xi32>
    %270 = arith.cmpi eq, %268, %269 : vector<16x128xi32>
    %cst_77 = arith.constant 0.000000e+00 : f32
    %271 = vector.broadcast %cst_77 : f32 to vector<16x128xf32>
    %272 = arith.select %270, %252, %271 : vector<16x128xi1>, vector<16x128xf32>
    %cst_78 = arith.constant dense<0.000000e+00> : vector<16xf32>
    %273 = vector.multi_reduction <add>, %272, %cst_78 [1] : vector<16x128xf32> to vector<16xf32>
    %274 = vector.shape_cast %273 : vector<16xf32> to vector<16x1xf32>
    %275 = arith.extui %255 : vector<16x1xi1> to vector<16x1xi32>
    %276 = arith.sitofp %275 : vector<16x1xi32> to vector<16x1xf32>
    %277 = arith.subf %267, %274 : vector<16x1xf32>
    %278 = arith.mulf %277, %276 : vector<16x1xf32>
    %cst_79 = arith.constant dense<0.000000e+00> : vector<1xf32>
    %279 = vector.multi_reduction <add>, %278, %cst_79 [0] : vector<16x1xf32> to vector<1xf32>
    %280 = vector.shape_cast %279 : vector<1xf32> to vector<1x1xf32>
    %cst_80 = arith.constant dense<0.000000e+00> : vector<1xf32>
    %281 = vector.multi_reduction <add>, %276, %cst_80 [0] : vector<16x1xf32> to vector<1xf32>
    %282 = vector.shape_cast %281 : vector<1xf32> to vector<1x1xf32>
    %cst_81 = arith.constant 1.000000e+00 : f32
    %283 = vector.broadcast %cst_81 : f32 to vector<1x1xf32>
    %284 = arith.maximumf %282, %283 : vector<1x1xf32>
    %285 = arith.divf %280, %284 : vector<1x1xf32>
    %c0_82 = arith.constant 0 : index
    %c0_83 = arith.constant 0 : index
    %286 = vector.load %arg3[%c0_82, %c0_83] : memref<1x1xf32, #tpu.memory_space<vmem>>, vector<1x1xf32>
    tpu.vector_store %arg3[%c0_82, %c0_83], %285 {strides = array<i32>} : memref<1x1xf32, #tpu.memory_space<vmem>>, vector<1x1xf32>,
    return
  }
}

</mosaic_0001>

<llo_original>
// kernel: evaluator_forward.1
$region0: #{evaluator_forward.1}
  #allocation0 [shape = 'u32[]', space=smem, size = 0x4, offset = 0x4, fixed_abs, tag = 'smem constant byte address 0x4 - core index']
  #allocation1 [shape = 'u32[72,128]{1,0:T(1,128)}', space=vmem, size = 0x9000, scoped, tag = 'internal scratch']
  %s0 = inlined_call_operand.vmem [shape: bf16[688,128], index: 0, kind: input, shape index: {}]
  %s1 = inlined_call_operand.vmem [shape: f32[32,256], index: 1, kind: input, shape index: {}]
  %s2 = inlined_call_operand.hbm [shape: f32[16,128], index: 2, kind: output, shape index: {0}]
  %s3 = inlined_call_operand.hbm [shape: f32[1,1], index: 3, kind: output, shape index: {1}]
  %4 = xla_tuple %s2, %s3
  %s5 = sld [smem:[#allocation0]]
  $region26: #{evaluator_forward.1} parent=0
    _
  %s7 = ssub.s32 1, %s5
  %s8 = scalar_select 0, %s7, %s5
  $region1: #{evaluator_forward.1} parent=0
    #allocation2 [shape = 'u8[8192]{0}', space=vmem, size = 0x2000, scoped, tag = 'output window, operand 0, single buffered']
    #allocation3 [shape = 's32[1]{0}', space=sflag, size = 0x4, scoped, tag = 'scoped memory for evaluator_forward.1']
    #allocation4 [shape = 'u8[512]{0}', space=vmem, size = 0x400, scoped, tag = 'output window, operand 1, single buffered']
    #allocation5 [shape = 's32[1]{0}', space=sflag, size = 0x4, scoped, tag = 'scoped memory for evaluator_forward.1']
    %9 = vsyncpa [#allocation3], 0
    %10 = vsyncpa [#allocation5], 0
    // Predicated region
    $region2: #{evaluator_forward.1} parent=1 // pred_check
      _
    $region3: #{evaluator_forward.1} parent=1 // pred_check_branch
      %12 = sbr.rel (0) target = $region5
    $region4: #{evaluator_forward.1} parent=1 // pred_region
      _
    $region5: #{evaluator_forward.1} parent=1 // pred_fallthru
      _
    // Predicated region
    $region6: #{evaluator_forward.1} parent=1 // pred_check
      _
    $region7: #{evaluator_forward.1} parent=1 // pred_check_branch
      %14 = sbr.rel (0) target = $region9
    $region8: #{evaluator_forward.1} parent=1 // pred_region
      _
    $region9: #{evaluator_forward.1} parent=1 // pred_fallthru
      _
    %v16 = vld [vmem:[%s0] sm:$0xf]
    %v17 = vld [vmem:[%s0 + $0x4] sm:$0xf]
    %v18 = vld [vmem:[%s0 + $0x8] sm:$0xf]
    %v19 = vld [vmem:[%s0 + $0xc] sm:$0xf]
    %v20 = vld [vmem:[%s0 + $0x10] sm:$0xf]
    %v21 = vld [vmem:[%s0 + $0x14] sm:$0xf]
    %v22 = vld [vmem:[%s0 + $0x18] sm:$0xf]
    %v23 = vld [vmem:[%s0 + $0x1c] sm:$0xf]
    %v24 = vld [vmem:[%s0 + $0x20] sm:$0xf]
    %v25 = vld [vmem:[%s0 + $0x24] sm:$0xf]
    %v26 = vld [vmem:[%s0 + $0x28] sm:$0xf]
    %v27 = vld [vmem:[%s0 + $0x2c] sm:$0xf]
    %v28 = vld [vmem:[%s0 + $0x30] sm:$0xf]
    %v29 = vld [vmem:[%s0 + $0x34] sm:$0xf]
    %v30 = vld [vmem:[%s0 + $0x38] sm:$0xf]
    %v31 = vld [vmem:[%s0 + $0x3c] sm:$0xf]
    %v32 = vld [vmem:[%s0 + $0x40] sm:$0xf]
    %v33 = vld [vmem:[%s0 + $0x44] sm:$0xf]
    %v34 = vld [vmem:[%s0 + $0x48] sm:$0xf]
    %v35 = vld [vmem:[%s0 + $0x4c] sm:$0xf]
    %v36 = vld [vmem:[%s0 + $0x50] sm:$0xf]
    %v37 = vld [vmem:[%s0 + $0x54] sm:$0xf]
    %v38 = vld [vmem:[%s0 + $0x58] sm:$0xf]
    %v39 = vld [vmem:[%s0 + $0x5c] sm:$0xf]
    %v40 = vld [vmem:[%s0 + $0x60] sm:$0xf]
    %v41 = vld [vmem:[%s0 + $0x64] sm:$0xf]
    %v42 = vld [vmem:[%s0 + $0x68] sm:$0xf]
    %v43 = vld [vmem:[%s0 + $0x6c] sm:$0xf]
    %v44 = vld [vmem:[%s0 + $0x70] sm:$0xf]
    %v45 = vld [vmem:[%s0 + $0x74] sm:$0xf]
    %v46 = vld [vmem:[%s0 + $0x78] sm:$0xf]
    %v47 = vld [vmem:[%s0 + $0x7c] sm:$0xf]
    %v48 = vld [vmem:[%s0 + $0x80] sm:$0xf]
    %v49 = vld [vmem:[%s0 + $0x84] sm:$0xf]
    %v50 = vld [vmem:[%s0 + $0x88] sm:$0xf]
    %v51 = vld [vmem:[%s0 + $0x8c] sm:$0xf]
    %v52 = vld [vmem:[%s0 + $0x90] sm:$0xf]
    %v53 = vld [vmem:[%s0 + $0x94] sm:$0xf]
    %v54 = vld [vmem:[%s0 + $0x98] sm:$0xf]
    %v55 = vld [vmem:[%s0 + $0x9c] sm:$0xf]
    %v56 = vld [vmem:[%s0 + $0xa0] sm:$0xf]
    %v57 = vld [vmem:[%s0 + $0xa4] sm:$0xf]
    %v58 = vld [vmem:[%s0 + $0xa8] sm:$0xf]
    %v59 = vld [vmem:[%s0 + $0xac] sm:$0xf]
    %v60 = vld [vmem:[%s0 + $0xb0] sm:$0xf]
    %v61 = vld [vmem:[%s0 + $0xb4] sm:$0xf]
    %v62 = vld [vmem:[%s0 + $0xb8] sm:$0xf]
    %v63 = vld [vmem:[%s0 + $0xbc] sm:$0xf]
    %v64 = vld [vmem:[%s0 + $0xc0] sm:$0xf]
    %v65 = vld [vmem:[%s0 + $0xc4] sm:$0xf]
    %v66 = vld [vmem:[%s0 + $0xc8] sm:$0xf]
    %v67 = vld [vmem:[%s0 + $0xcc] sm:$0xf]
    %v68 = vld [vmem:[%s0 + $0xd0] sm:$0xf]
    %v69 = vld [vmem:[%s0 + $0xd4] sm:$0xf]
    %v70 = vld [vmem:[%s0 + $0xd8] sm:$0xf]
    %v71 = vld [vmem:[%s0 + $0xdc] sm:$0xf]
    %v72 = vld [vmem:[%s0 + $0xe0] sm:$0xf]
    %v73 = vld [vmem:[%s0 + $0xe4] sm:$0xf]
    %v74 = vld [vmem:[%s0 + $0xe8] sm:$0xf]
    %v75 = vld [vmem:[%s0 + $0xec] sm:$0xf]
    %v76 = vld [vmem:[%s0 + $0xf0] sm:$0xf]
    %v77 = vld [vmem:[%s0 + $0xf4] sm:$0xf]
    %v78 = vld [vmem:[%s0 + $0xf8] sm:$0xf]
    %v79 = vld [vmem:[%s0 + $0xfc] sm:$0xf]
    %v80 = vld [vmem:[%s0 + $0x100] sm:$0xf]
    %v81 = vld [vmem:[%s0 + $0x104] sm:$0xf]
    %v82 = vld [vmem:[%s0 + $0x108] sm:$0xf]
    %v83 = vld [vmem:[%s0 + $0x10c] sm:$0xf]
    %v84 = vld [vmem:[%s0 + $0x110] sm:$0xf]
    %v85 = vld [vmem:[%s0 + $0x114] sm:$0xf]
    %v86 = vld [vmem:[%s0 + $0x118] sm:$0xf]
    %v87 = vld [vmem:[%s0 + $0x11c] sm:$0xf]
    %v88 = vld [vmem:[%s0 + $0x120] sm:$0xf]
    %v89 = vld [vmem:[%s0 + $0x124] sm:$0xf]
    %v90 = vld [vmem:[%s0 + $0x128] sm:$0xf]
    %v91 = vld [vmem:[%s0 + $0x12c] sm:$0xf]
    %v92 = vld [vmem:[%s0 + $0x130] sm:$0xf]
    %v93 = vld [vmem:[%s0 + $0x134] sm:$0xf]
    %v94 = vld [vmem:[%s0 + $0x138] sm:$0xf]
    %v95 = vld [vmem:[%s0 + $0x13c] sm:$0xf]
    %v96 = vld [vmem:[%s0 + $0x140] sm:$0xf]
    %v97 = vld [vmem:[%s0 + $0x144] sm:$0xf]
    %v98 = vld [vmem:[%s0 + $0x148] sm:$0xf]
    %v99 = vld [vmem:[%s0 + $0x14c] sm:$0xf]
    %v100 = vld [vmem:[%s0 + $0x150] sm:$0x1]
    %v101 = vunpack.c.l.bf16 %v100
    %v102 = vld [vmem:[%s1] sm:$0xff]
    %v103 = vld [vmem:[%s1 + $0x8] sm:$0xff]
    %v104 = vpack.c.bf16 %v102, %v102
    %v105 = vpack.c.bf16 %v103, %v103
    %v106 = vld [vmem:[%s1 + $0x10] sm:$0xff]
    %v107 = vld [vmem:[%s1 + $0x20] sm:$0xff]
    %v108 = vld [vmem:[%s1 + $0x30] ss:$0 sm:$0xff]
    %v141 = vunpack.c.l.b16 %v16
    %v142 = vunpack.c.l.b16 %v17
    %v143 = vunpack.c.l.b16 %v18
    %v144 = vunpack.c.l.b16 %v19
    %v145 = vunpack.c.l.b16 %v20
    %v146 = vunpack.c.l.b16 %v21
    %v147 = vunpack.c.l.b16 %v22
    %v148 = vunpack.c.l.b16 %v23
    %v149 = vunpack.c.l.b16 %v24
    %v150 = vunpack.c.l.b16 %v25
    %v151 = vunpack.c.l.b16 %v26
    %v152 = vunpack.c.l.b16 %v27
    %v153 = vunpack.c.l.b16 %v28
    %v154 = vunpack.c.l.b16 %v29
    %v155 = vunpack.c.l.b16 %v30
    %v156 = vunpack.c.l.b16 %v31
    %v157 = vunpack.c.l.b16 %v32
    %v158 = vunpack.c.l.b16 %v33
    %v159 = vunpack.c.l.b16 %v34
    %v160 = vunpack.c.l.b16 %v35
    %v161 = vunpack.c.l.b16 %v36
    %v162 = vunpack.c.l.b16 %v37
    %v163 = vunpack.c.l.b16 %v38
    %v164 = vunpack.c.l.b16 %v39
    %v165 = vunpack.c.l.b16 %v40
    %v166 = vunpack.c.l.b16 %v41
    %v167 = vunpack.c.l.b16 %v42
    %v168 = vunpack.c.l.b16 %v43
    %v169 = vunpack.c.l.b16 %v44
    %v170 = vunpack.c.l.b16 %v45
    %v171 = vunpack.c.l.b16 %v46
    %v172 = vunpack.c.l.b16 %v47
    %v173 = vpack.c.b16 %v142, %v141
    %v174 = vpack.c.b16 %v144, %v143
    %v175 = vpack.c.b16 %v146, %v145
    %v176 = vpack.c.b16 %v148, %v147
    %v177 = vpack.c.b16 %v150, %v149
    %v178 = vpack.c.b16 %v152, %v151
    %v179 = vpack.c.b16 %v154, %v153
    %v180 = vpack.c.b16 %v156, %v155
    %v181 = vpack.c.b16 %v158, %v157
    %v182 = vpack.c.b16 %v160, %v159
    %v183 = vpack.c.b16 %v162, %v161
    %v184 = vpack.c.b16 %v164, %v163
    %v185 = vpack.c.b16 %v166, %v165
    %v186 = vpack.c.b16 %v168, %v167
    %v187 = vpack.c.b16 %v170, %v169
    %v188 = vpack.c.b16 %v172, %v171
    %205 = vmatpush.bf16.msra.mxu0 %v180
    %206 = vmatpush.bf16.msra.mxu0 %v179
    %207 = vmatpush.bf16.msra.mxu0 %v178
    %208 = vmatpush.bf16.msra.mxu0 %v177
    %209 = vmatpush.bf16.msra.mxu0 %v176
    %210 = vmatpush.bf16.msra.mxu0 %v175
    %211 = vmatpush.bf16.msra.mxu0 %v174
    %212 = vmatpush.bf16.msra.mxu0 %v173
    %213 = vmatmul.bf16.gmra.mxu0 %v104
    %v214 = vpop.f32.mrf.mxu0
    %v215 = vadd.f32 0.0, %v214
    %v216 = vpop.f32.mrf.mxu0
    %217 = vdwg.mxu0
    %218 = vmatpush.bf16.msra.mxu0 %v188
    %219 = vmatpush.bf16.msra.mxu0 %v187
    %220 = vmatpush.bf16.msra.mxu0 %v186
    %221 = vmatpush.bf16.msra.mxu0 %v185
    %222 = vmatpush.bf16.msra.mxu0 %v184
    %223 = vmatpush.bf16.msra.mxu0 %v183
    %224 = vmatpush.bf16.msra.mxu0 %v182
    %225 = vmatpush.bf16.msra.mxu0 %v181
    %226 = vmatmul.bf16.gmra.mxu0 %v105
    %v227 = vpop.f32.mrf.mxu0
    %v228 = vadd.f32 %v215, %v227
    %v229 = vpop.f32.mrf.mxu0
    %230 = vdwg.mxu0
    %v231 = vmul.f32 %v228, %v228
    %v232 = vmul.f32 %v228, %v231
    %v233 = vmul.f32 %v232, 0.044715
    %v234 = vadd.f32 %v228, %v233
    %v235 = vmul.f32 %v234, 0.7978846
    %v236 = vtanh.pop %v235
    %v237 = vadd.f32 %v236, 1.0
    %v238 = vmul.f32 %v237, 0.5
    %v239 = vmul.f32 %v228, %v238
    %v240 = vpack.c.bf16 %v239, %v239
    %v241 = vperm.slane %v101, 0
    %v246 = vunpack.c.l.b16 %v48
    %v247 = vunpack.c.l.b16 %v49
    %v248 = vunpack.c.l.b16 %v50
    %v249 = vunpack.c.l.b16 %v51
    %v250 = vpack.c.b16 %v247, %v246
    %v251 = vpack.c.b16 %v249, %v248
    %vm254 = vcmask 261120
    %v256 = vsel %vm254, %v240, 0
    %258 = vmatpush.bf16.msra.mxu0 0
    %259 = vmatpush.bf16.msra.mxu0 0
    %260 = vmatpush.bf16.msra.mxu0 0
    %261 = vmatpush.bf16.msra.mxu0 0
    %262 = vmatpush.bf16.msra.mxu0 0
    %263 = vmatpush.bf16.msra.mxu0 0
    %264 = vmatpush.bf16.msra.mxu0 %v251
    %265 = vmatpush.bf16.msra.mxu0 %v250
    %266 = vmatmul.bf16.gmra.mxu0 %v256
    %v267 = vpop.f32.mrf.mxu0
    %v268 = vadd.f32 %v241, %v267
    %v269 = vpop.f32.mrf.mxu0
    %270 = vdwg.mxu0
    %v271 = vpack.c.bf16 %v268, %v268
    %v272 = vlaneseq
    %v273 = vshrl.u32 %v272, 7
    %v274 = vadd.s32 %v273, 8
    %v275 = vadd.s32 %v273, 16
    %v276 = vadd.s32 %v273, 24
    %v277 = vadd.s32 %v273, 32
    %v278 = vadd.s32 %v273, 40
    %v279 = vadd.s32 %v273, 48
    %v280 = vadd.s32 %v273, 56
    %v281 = vlaneseq
    %v282 = vand.u32 %v281, 127
    %v283 = vand.u32 %v273, 15
    %v284 = vand.u32 %v274, 15
    %v285 = vand.u32 %v275, 15
    %v286 = vand.u32 %v276, 15
    %v287 = vand.u32 %v277, 15
    %v288 = vand.u32 %v278, 15
    %v289 = vand.u32 %v279, 15
    %v290 = vand.u32 %v280, 15
    %v291 = vshra.s32 %v283, 3
    %v292 = vshra.s32 %v284, 3
    %v293 = vshra.s32 %v285, 3
    %v294 = vshra.s32 %v286, 3
    %v295 = vshra.s32 %v287, 3
    %v296 = vshra.s32 %v288, 3
    %v297 = vshra.s32 %v289, 3
    %v298 = vshra.s32 %v290, 3
    %v299 = vshra.s32 %v282, 3
    %vm300 = vcmp.eq.s32.totalorder %v291, %v299
    %vm301 = vcmp.eq.s32.totalorder %v292, %v299
    %vm302 = vcmp.eq.s32.totalorder %v293, %v299
    %vm303 = vcmp.eq.s32.totalorder %v294, %v299
    %vm304 = vcmp.eq.s32.totalorder %v295, %v299
    %vm305 = vcmp.eq.s32.totalorder %v296, %v299
    %vm306 = vcmp.eq.s32.totalorder %v297, %v299
    %vm307 = vcmp.eq.s32.totalorder %v298, %v299
    %v308 = vand.u32 %v283, 7
    %v309 = vand.u32 %v284, 7
    %v310 = vand.u32 %v285, 7
    %v311 = vand.u32 %v286, 7
    %v312 = vand.u32 %v287, 7
    %v313 = vand.u32 %v288, 7
    %v314 = vand.u32 %v289, 7
    %v315 = vand.u32 %v290, 7
    %v316 = vand.u32 %v282, 7
    %vm317 = vcmp.ge.s32.totalorder %v308, %v316
    %vm318 = vcmp.ge.s32.totalorder %v309, %v316
    %vm319 = vcmp.ge.s32.totalorder %v310, %v316
    %vm320 = vcmp.ge.s32.totalorder %v311, %v316
    %vm321 = vcmp.ge.s32.totalorder %v312, %v316
    %vm322 = vcmp.ge.s32.totalorder %v313, %v316
    %vm323 = vcmp.ge.s32.totalorder %v314, %v316
    %vm324 = vcmp.ge.s32.totalorder %v315, %v316
    %vm325 = vcmp.eq.f32.partialorder %v108, 1.0
    %v326 = vsel %vm325, 1, 0
    %vm327 = vcmp.eq.s32.totalorder %v326, 1
    %vm328 = vmand %vm317, %vm327
    %vm329 = vmand %vm318, %vm327
    %vm330 = vmand %vm319, %vm327
    %vm331 = vmand %vm320, %vm327
    %vm332 = vmand %vm321, %vm327
    %vm333 = vmand %vm322, %vm327
    %vm334 = vmand %vm323, %vm327
    %vm335 = vmand %vm324, %vm327
    %v336 = vsel %vm328, 0.0, -1000000.0
    %v337 = vsel %vm329, 0.0, -1000000.0
    %v338 = vsel %vm330, 0.0, -1000000.0
    %v339 = vsel %vm331, 0.0, -1000000.0
    %v340 = vsel %vm332, 0.0, -1000000.0
    %v341 = vsel %vm333, 0.0, -1000000.0
    %v342 = vsel %vm334, 0.0, -1000000.0
    %v343 = vsel %vm335, 0.0, -1000000.0
    %v344 = vsel %vm300, %v336, -1e+09
    %v345 = vsel %vm301, %v337, -1e+09
    %v346 = vsel %vm302, %v338, -1e+09
    %v347 = vsel %vm303, %v339, -1e+09
    %v348 = vsel %vm304, %v340, -1e+09
    %v349 = vsel %vm305, %v341, -1e+09
    %v350 = vsel %vm306, %v342, -1e+09
    %v351 = vsel %vm307, %v343, -1e+09
    %v352 = vshra.s32 %v282, 2
    %vm353 = vcmp.eq.s32.totalorder %v291, %v352
    %vm354 = vcmp.eq.s32.totalorder %v292, %v352
    %vm355 = vcmp.eq.s32.totalorder %v293, %v352
    %vm356 = vcmp.eq.s32.totalorder %v294, %v352
    %vm357 = vcmp.eq.s32.totalorder %v295, %v352
    %vm358 = vcmp.eq.s32.totalorder %v296, %v352
    %vm359 = vcmp.eq.s32.totalorder %v297, %v352
    %vm360 = vcmp.eq.s32.totalorder %v298, %v352
    %v361 = vsel %vm353, 0.0, -1e+09
    %v362 = vsel %vm354, 0.0, -1e+09
    %v363 = vsel %vm355, 0.0, -1e+09
    %v364 = vsel %vm356, 0.0, -1e+09
    %v365 = vsel %vm357, 0.0, -1e+09
    %v366 = vsel %vm358, 0.0, -1e+09
    %v367 = vsel %vm359, 0.0, -1e+09
    %v368 = vsel %vm360, 0.0, -1e+09
    %v369 = vand.u32 %v273, 7
    %v370 = vand.u32 %v274, 7
    %v371 = vcvt.s32.f32 %v369
    %v372 = vcvt.s32.f32 %v370
    %vm373 = vcmp.ge.f32.partialorder %v371, %v106
    %vm374 = vcmp.ge.f32.partialorder %v372, %v107
    %vm375 = vcmp.eq.f32.partialorder %v106, 1.0
    %vm376 = vcmp.eq.f32.partialorder %v107, 1.0
    %v377 = vsel %vm375, 1, 0
    %v378 = vsel %vm376, 1, 0
    %379 = vrot.lane.b32.xlu0 %v377, 1
    %v380 = vpop.permute.xlu0 %379
    %381 = vrot.lane.b32.xlu0 %v378, 1
    %v382 = vpop.permute.xlu0 %381
    %vm383 = vcmp.ne.s32.totalorder %v380, 0
    %vm384 = vcmp.ne.s32.totalorder %v382, 0
    %vm385 = vmand %vm373, %vm383
    %vm386 = vmand %vm374, %vm384
    %v387 = vsel %vm385, 1, 0
    %v388 = vsel %vm386, 1, 0
    %v389 = vcvt.s32.f32 %v387
    %v390 = vcvt.s32.f32 %v388
    %v391 = vmul.f32 %v106, %v106
    %v392 = vmul.f32 %v107, %v107
    %395 = vrot.lane.b32.xlu0 %v391, 96
    %v396 = vpop.permute.xlu0 %395
    %397 = vrot.lane.b32.xlu0 %v392, 96
    %v398 = vpop.permute.xlu0 %397
    %v401 = vsel %vm254, %v396, 0.0
    %402 = vadd.xlane.f32.xlu0 %v401
    %v403 = vpop.xlane.xlu0 %402
    %v404 = vsel %vm254, %v398, 0.0
    %405 = vadd.xlane.f32.xlu0 %v404
    %v406 = vpop.xlane.xlu0 %405
    %v407 = vrcp.pop 32.0
    %v408 = vmul.f32 32.0, %v407
    %v409 = vsub.f32 1.0, %v408
    %v410 = vmul.f32 %v407, %v409
    %v411 = vadd.f32 %v407, %v410
    %vm412 = vweird.f32 %v407
    %v413 = vsel %vm412, %v407, %v411
    %v414 = vmul.f32 %v403, %v413
    %v415 = vmul.f32 %v406, %v413
    %v416 = vadd.f32 %v414, 1e-06
    %v417 = vadd.f32 %v415, 1e-06
    %v418 = vrsqrt.pop %v416
    %v419 = vmul.f32 %v418, %v416
    %v420 = vmul.f32 %v419, %v418
    %v421 = vmul.f32 0.5, %v420
    %v422 = vsub.f32 1.5, %v421
    %v423 = vmul.f32 %v418, %v422
    %vm424 = vweird.f32 %v416
    %vm425 = vweird.f32 %v418
    %vm426 = vmor %vm424, %vm425
    %v427 = vsel %vm426, %v418, %v423
    %v428 = vrsqrt.pop %v417
    %v429 = vmul.f32 %v428, %v417
    %v430 = vmul.f32 %v429, %v428
    %v431 = vmul.f32 0.5, %v430
    %v432 = vsub.f32 1.5, %v431
    %v433 = vmul.f32 %v428, %v432
    %vm434 = vweird.f32 %v417
    %vm435 = vweird.f32 %v428
    %vm436 = vmor %vm434, %vm435
    %v437 = vsel %vm436, %v428, %v433
    %v438 = vmul.f32 %v106, %v427
    %v439 = vmul.f32 %v107, %v437
    %v440 = vpack.c.bf16 %v438, %v438
    %v441 = vpack.c.bf16 %v439, %v439
    %v444 = vunpack.c.l.b16 %v440
    %v445 = vunpack.c.l.b16 %v441
    %v446 = vpack.c.b16 %v445, %v444
    %447 = vrot.lane.b32.xlu0 %v446, 96
    %v448 = vpop.permute.xlu0 %447
    %449 = vrot.lane.b32.xlu0 %v446, 32
    %v450 = vpop.permute.xlu0 %449
    %451 = vrot.lane.b32.xlu0 %v446, 64
    %v452 = vpop.permute.xlu0 %451
    %v455 = vsel %vm254, %v448, %v446
    %vm456 = vcmask 523264
    %v458 = vsel %vm456, %v455, %v450
    %vm459 = vcmask 785408
    %v461 = vsel %vm459, %v458, %v452
    %v463 = vshra.s32 %v273, 4
    %v464 = vshra.s32 %v274, 4
    %v465 = vshra.s32 %v275, 4
    %v466 = vshra.s32 %v276, 4
    %v467 = vshra.s32 %v277, 4
    %v468 = vshra.s32 %v278, 4
    %v469 = vshra.s32 %v279, 4
    %v470 = vshra.s32 %v280, 4
    %v471 = vshra.s32 %v282, 5
    %vm472 = vcmp.eq.s32.totalorder %v463, %v471
    %vm473 = vcmp.eq.s32.totalorder %v464, %v471
    %vm474 = vcmp.eq.s32.totalorder %v465, %v471
    %vm475 = vcmp.eq.s32.totalorder %v466, %v471
    %vm476 = vcmp.eq.s32.totalorder %v467, %v471
    %vm477 = vcmp.eq.s32.totalorder %v468, %v471
    %vm478 = vcmp.eq.s32.totalorder %v469, %v471
    %vm479 = vcmp.eq.s32.totalorder %v470, %v471
    %vm480 = vmpackc.low %vm473, %vm472
    %vm481 = vmpackc.low %vm475, %vm474
    %vm482 = vmpackc.low %vm477, %vm476
    %vm483 = vmpackc.low %vm479, %vm478
    %v484 = vsel %vm480, %v461, 0
    %v485 = vsel %vm481, %v461, 0
    %v486 = vsel %vm482, %v461, 0
    %v487 = vsel %vm483, %v461, 0
    %v504 = vunpack.c.l.b16 %v52
    %v505 = vunpack.c.l.b16 %v53
    %v506 = vunpack.c.l.b16 %v54
    %v507 = vunpack.c.l.b16 %v55
    %v508 = vunpack.c.l.b16 %v56
    %v509 = vunpack.c.l.b16 %v57
    %v510 = vunpack.c.l.b16 %v58
    %v511 = vunpack.c.l.b16 %v59
    %v512 = vunpack.c.l.b16 %v60
    %v513 = vunpack.c.l.b16 %v61
    %v514 = vunpack.c.l.b16 %v62
    %v515 = vunpack.c.l.b16 %v63
    %v516 = vunpack.c.l.b16 %v64
    %v517 = vunpack.c.l.b16 %v65
    %v518 = vunpack.c.l.b16 %v66
    %v519 = vunpack.c.l.b16 %v67
    %v520 = vpack.c.b16 %v505, %v504
    %v521 = vpack.c.b16 %v507, %v506
    %v522 = vpack.c.b16 %v509, %v508
    %v523 = vpack.c.b16 %v511, %v510
    %v524 = vpack.c.b16 %v513, %v512
    %v525 = vpack.c.b16 %v515, %v514
    %v526 = vpack.c.b16 %v517, %v516
    %v527 = vpack.c.b16 %v519, %v518
    %536 = vmatpush.bf16.msra.mxu0 %v527
    %537 = vmatpush.bf16.msra.mxu0 %v526
    %538 = vmatpush.bf16.msra.mxu0 %v525
    %539 = vmatpush.bf16.msra.mxu0 %v524
    %540 = vmatpush.bf16.msra.mxu0 %v523
    %541 = vmatpush.bf16.msra.mxu0 %v522
    %542 = vmatpush.bf16.msra.mxu0 %v521
    %543 = vmatpush.bf16.msra.mxu0 %v520
    %544 = vmatmul.bf16.gmra.mxu0 %v484
    %v545 = vpop.f32.mrf.mxu0
    %v546 = vadd.f32 0.0, %v545
    %v547 = vpop.f32.mrf.mxu0
    %v548 = vadd.f32 0.0, %v547
    %549 = vmatmul.bf16.gmra.mxu0 %v485
    %v550 = vpop.f32.mrf.mxu0
    %v551 = vadd.f32 0.0, %v550
    %v552 = vpop.f32.mrf.mxu0
    %v553 = vadd.f32 0.0, %v552
    %554 = vmatmul.bf16.gmra.mxu0 %v486
    %v555 = vpop.f32.mrf.mxu0
    %v556 = vadd.f32 0.0, %v555
    %v557 = vpop.f32.mrf.mxu0
    %v558 = vadd.f32 0.0, %v557
    %559 = vmatmul.bf16.gmra.mxu0 %v487
    %v560 = vpop.f32.mrf.mxu0
    %v561 = vadd.f32 0.0, %v560
    %v562 = vpop.f32.mrf.mxu0
    %v563 = vadd.f32 0.0, %v562
    %564 = vdwg.mxu0
    %v565 = vpack.c.bf16 %v548, %v546
    %v566 = vpack.c.bf16 %v553, %v551
    %v567 = vpack.c.bf16 %v558, %v556
    %v568 = vpack.c.bf16 %v563, %v561
    %v570 = vsel %vm254, %v565, 0
    %v573 = vsel %vm254, %v566, 0
    %v576 = vsel %vm254, %v567, 0
    %v579 = vsel %vm254, %v568, 0
    %v581 = vsel %vm254, %v448, 0
    %583 = vmatpush.bf16.xpose.msra.mxu0 0
    %584 = vmatpush.bf16.xpose.msra.mxu0 0
    %585 = vmatpush.bf16.xpose.msra.mxu0 0
    %586 = vmatpush.bf16.xpose.msra.mxu0 0
    %587 = vmatpush.bf16.xpose.msra.mxu0 0
    %588 = vmatpush.bf16.xpose.msra.mxu0 0
    %589 = vmatpush.bf16.xpose.msra.mxu0 0
    %590 = vmatpush.bf16.xpose.msra.mxu0 %v581
    %591 = vmatmul.bf16.gmra.mxu0 %v570
    %v592 = vpop.f32.mrf.mxu0
    %v593 = vadd.f32 %v344, %v592
    %v594 = vpop.f32.mrf.mxu0
    %v595 = vadd.f32 %v345, %v594
    %596 = vmatmul.bf16.gmra.mxu0 %v573
    %v597 = vpop.f32.mrf.mxu0
    %v598 = vadd.f32 %v346, %v597
    %v599 = vpop.f32.mrf.mxu0
    %v600 = vadd.f32 %v347, %v599
    %601 = vmatmul.bf16.gmra.mxu0 %v576
    %v602 = vpop.f32.mrf.mxu0
    %v603 = vadd.f32 %v348, %v602
    %v604 = vpop.f32.mrf.mxu0
    %v605 = vadd.f32 %v349, %v604
    %606 = vmatmul.bf16.gmra.mxu0 %v579
    %v607 = vpop.f32.mrf.mxu0
    %v608 = vadd.f32 %v350, %v607
    %v609 = vpop.f32.mrf.mxu0
    %v610 = vadd.f32 %v351, %v609
    %611 = vdwg.mxu0
    %vm612 = vcmask 130048
    %v613 = vsel %vm612, %v593, -inf
    %614 = vmax.xlane.f32.xlu0 %v613
    %v615 = vpop.xlane.xlu0 %614
    %v616 = vsel %vm612, %v595, -inf
    %617 = vmax.xlane.f32.xlu0 %v616
    %v618 = vpop.xlane.xlu0 %617
    %v619 = vsel %vm612, %v598, -inf
    %620 = vmax.xlane.f32.xlu0 %v619
    %v621 = vpop.xlane.xlu0 %620
    %v622 = vsel %vm612, %v600, -inf
    %623 = vmax.xlane.f32.xlu0 %v622
    %v624 = vpop.xlane.xlu0 %623
    %v625 = vsel %vm612, %v603, -inf
    %626 = vmax.xlane.f32.xlu0 %v625
    %v627 = vpop.xlane.xlu0 %626
    %v628 = vsel %vm612, %v605, -inf
    %629 = vmax.xlane.f32.xlu0 %v628
    %v630 = vpop.xlane.xlu0 %629
    %v631 = vsel %vm612, %v608, -inf
    %632 = vmax.xlane.f32.xlu0 %v631
    %v633 = vpop.xlane.xlu0 %632
    %v634 = vsel %vm612, %v610, -inf
    %635 = vmax.xlane.f32.xlu0 %v634
    %v636 = vpop.xlane.xlu0 %635
    %v637 = vsub.f32 %v593, %v615
    %v638 = vsub.f32 %v595, %v618
    %v639 = vsub.f32 %v598, %v621
    %v640 = vsub.f32 %v600, %v624
    %v641 = vsub.f32 %v603, %v627
    %v642 = vsub.f32 %v605, %v630
    %v643 = vsub.f32 %v608, %v633
    %v644 = vsub.f32 %v610, %v636
    %v645 = vmul.f32 %v637, 1.442695
    %v646 = vpow.pop %v645
    %v647 = vmul.f32 %v638, 1.442695
    %v648 = vpow.pop %v647
    %v649 = vmul.f32 %v639, 1.442695
    %v650 = vpow.pop %v649
    %v651 = vmul.f32 %v640, 1.442695
    %v652 = vpow.pop %v651
    %v653 = vmul.f32 %v641, 1.442695
    %v654 = vpow.pop %v653
    %v655 = vmul.f32 %v642, 1.442695
    %v656 = vpow.pop %v655
    %v657 = vmul.f32 %v643, 1.442695
    %v658 = vpow.pop %v657
    %v659 = vmul.f32 %v644, 1.442695
    %v660 = vpow.pop %v659
    %v661 = vsel %vm612, %v646, 0.0
    %662 = vadd.xlane.f32.xlu0 %v661
    %v663 = vpop.xlane.xlu0 %662
    %v664 = vsel %vm612, %v648, 0.0
    %665 = vadd.xlane.f32.xlu0 %v664
    %v666 = vpop.xlane.xlu0 %665
    %v667 = vsel %vm612, %v650, 0.0
    %668 = vadd.xlane.f32.xlu0 %v667
    %v669 = vpop.xlane.xlu0 %668
    %v670 = vsel %vm612, %v652, 0.0
    %671 = vadd.xlane.f32.xlu0 %v670
    %v672 = vpop.xlane.xlu0 %671
    %v673 = vsel %vm612, %v654, 0.0
    %674 = vadd.xlane.f32.xlu0 %v673
    %v675 = vpop.xlane.xlu0 %674
    %v676 = vsel %vm612, %v656, 0.0
    %677 = vadd.xlane.f32.xlu0 %v676
    %v678 = vpop.xlane.xlu0 %677
    %v679 = vsel %vm612, %v658, 0.0
    %680 = vadd.xlane.f32.xlu0 %v679
    %v681 = vpop.xlane.xlu0 %680
    %v682 = vsel %vm612, %v660, 0.0
    %683 = vadd.xlane.f32.xlu0 %v682
    %v684 = vpop.xlane.xlu0 %683
    %v685 = vrcp.pop %v663
    %v686 = vrcp.pop %v666
    %v687 = vrcp.pop %v669
    %v688 = vrcp.pop %v672
    %v689 = vrcp.pop %v675
    %v690 = vrcp.pop %v678
    %v691 = vrcp.pop %v681
    %v692 = vrcp.pop %v684
    %v693 = vmul.f32 %v646, %v685
    %v694 = vmul.f32 %v648, %v686
    %v695 = vmul.f32 %v650, %v687
    %v696 = vmul.f32 %v652, %v688
    %v697 = vmul.f32 %v654, %v689
    %v698 = vmul.f32 %v656, %v690
    %v699 = vmul.f32 %v658, %v691
    %v700 = vmul.f32 %v660, %v692
    %v701 = vpack.c.bf16 %v693, %v693
    %v702 = vpack.c.bf16 %v694, %v694
    %v703 = vpack.c.bf16 %v695, %v695
    %v704 = vpack.c.bf16 %v696, %v696
    %v705 = vpack.c.bf16 %v697, %v697
    %v706 = vpack.c.bf16 %v698, %v698
    %v707 = vpack.c.bf16 %v699, %v699
    %v708 = vpack.c.bf16 %v700, %v700
    %v717 = vunpack.c.l.b16 %v701
    %v718 = vunpack.c.l.b16 %v702
    %v719 = vunpack.c.l.b16 %v703
    %v720 = vunpack.c.l.b16 %v704
    %v721 = vunpack.c.l.b16 %v705
    %v722 = vunpack.c.l.b16 %v706
    %v723 = vunpack.c.l.b16 %v707
    %v724 = vunpack.c.l.b16 %v708
    %v725 = vpack.c.b16 %v718, %v717
    %v726 = vpack.c.b16 %v720, %v719
    %v727 = vpack.c.b16 %v722, %v721
    %v728 = vpack.c.b16 %v724, %v723
    %729 = vrot.lane.b32.xlu0 %v725, 16
    %v730 = vpop.permute.xlu0 %729
    %731 = vrot.lane.b32.xlu0 %v726, 16
    %v732 = vpop.permute.xlu0 %731
    %733 = vrot.lane.b32.xlu0 %v727, 16
    %v734 = vpop.permute.xlu0 %733
    %735 = vrot.lane.b32.xlu0 %v728, 16
    %v736 = vpop.permute.xlu0 %735
    %737 = vrot.lane.b32.xlu0 %v725, 32
    %v738 = vpop.permute.xlu0 %737
    %739 = vrot.lane.b32.xlu0 %v726, 32
    %v740 = vpop.permute.xlu0 %739
    %741 = vrot.lane.b32.xlu0 %v727, 32
    %v742 = vpop.permute.xlu0 %741
    %743 = vrot.lane.b32.xlu0 %v728, 32
    %v744 = vpop.permute.xlu0 %743
    %745 = vrot.lane.b32.xlu0 %v725, 48
    %v746 = vpop.permute.xlu0 %745
    %747 = vrot.lane.b32.xlu0 %v726, 48
    %v748 = vpop.permute.xlu0 %747
    %749 = vrot.lane.b32.xlu0 %v727, 48
    %v750 = vpop.permute.xlu0 %749
    %751 = vrot.lane.b32.xlu0 %v728, 48
    %v752 = vpop.permute.xlu0 %751
    %v755 = vsel %vm612, %v725, %v730
    %v758 = vsel %vm612, %v726, %v732
    %v761 = vsel %vm612, %v727, %v734
    %v764 = vsel %vm612, %v728, %v736
    %v766 = vsel %vm254, %v755, %v738
    %v768 = vsel %vm254, %v758, %v740
    %v770 = vsel %vm254, %v761, %v742
    %v772 = vsel %vm254, %v764, %v744
    %vm773 = vcmask 392192
    %v775 = vsel %vm773, %v766, %v746
    %v778 = vsel %vm773, %v768, %v748
    %v781 = vsel %vm773, %v770, %v750
    %v784 = vsel %vm773, %v772, %v752
    %v786 = vshra.s32 %v282, 4
    %vm787 = vcmp.eq.s32.totalorder %v463, %v786
    %vm788 = vcmp.eq.s32.totalorder %v464, %v786
    %vm789 = vcmp.eq.s32.totalorder %v465, %v786
    %vm790 = vcmp.eq.s32.totalorder %v466, %v786
    %vm791 = vcmp.eq.s32.totalorder %v467, %v786
    %vm792 = vcmp.eq.s32.totalorder %v468, %v786
    %vm793 = vcmp.eq.s32.totalorder %v469, %v786
    %vm794 = vcmp.eq.s32.totalorder %v470, %v786
    %vm795 = vmpackc.low %vm788, %vm787
    %vm796 = vmpackc.low %vm790, %vm789
    %vm797 = vmpackc.low %vm792, %vm791
    %vm798 = vmpackc.low %vm794, %vm793
    %v799 = vsel %vm795, %v775, 0
    %v800 = vsel %vm796, %v778, 0
    %v801 = vsel %vm797, %v781, 0
    %v802 = vsel %vm798, %v784, 0
    %807 = vrot.lane.b32.xlu0 %v565, 96
    %v808 = vpop.permute.xlu0 %807
    %809 = vrot.lane.b32.xlu0 %v566, 96
    %v810 = vpop.permute.xlu0 %809
    %811 = vrot.lane.b32.xlu0 %v567, 96
    %v812 = vpop.permute.xlu0 %811
    %813 = vrot.lane.b32.xlu0 %v568, 96
    %v814 = vpop.permute.xlu0 %813
    %v820 = vsel %vm456, %v799, 0
    %v823 = vsel %vm456, %v800, 0
    %v826 = vsel %vm456, %v801, 0
    %v829 = vsel %vm456, %v802, 0
    %831 = vmatpush.bf16.msra.mxu0 0
    %832 = vmatpush.bf16.msra.mxu0 0
    %833 = vmatpush.bf16.msra.mxu0 0
    %834 = vmatpush.bf16.msra.mxu0 0
    %835 = vmatpush.bf16.msra.mxu0 %v814
    %836 = vmatpush.bf16.msra.mxu0 %v812
    %837 = vmatpush.bf16.msra.mxu0 %v810
    %838 = vmatpush.bf16.msra.mxu0 %v808
    %839 = vmatmul.bf16.gmra.mxu0 %v820
    %v840 = vpop.f32.mrf.mxu0
    %v841 = vadd.f32 0.0, %v840
    %v842 = vpop.f32.mrf.mxu0
    %v843 = vadd.f32 0.0, %v842
    %844 = vmatmul.bf16.gmra.mxu0 %v823
    %v845 = vpop.f32.mrf.mxu0
    %v846 = vadd.f32 0.0, %v845
    %v847 = vpop.f32.mrf.mxu0
    %v848 = vadd.f32 0.0, %v847
    %849 = vmatmul.bf16.gmra.mxu0 %v826
    %v850 = vpop.f32.mrf.mxu0
    %v851 = vadd.f32 0.0, %v850
    %v852 = vpop.f32.mrf.mxu0
    %v853 = vadd.f32 0.0, %v852
    %854 = vmatmul.bf16.gmra.mxu0 %v829
    %v855 = vpop.f32.mrf.mxu0
    %v856 = vadd.f32 0.0, %v855
    %v857 = vpop.f32.mrf.mxu0
    %v858 = vadd.f32 0.0, %v857
    %859 = vdwg.mxu0
    %v860 = vadd.f32 %v841, %v846
    %v861 = vadd.f32 %v843, %v848
    %v862 = vadd.f32 %v860, %v851
    %v863 = vadd.f32 %v861, %v853
    %v864 = vadd.f32 %v862, %v856
    %v865 = vadd.f32 %v863, %v858
    %868 = vrot.lane.b32.xlu0 %v864, 32
    %v869 = vpop.permute.xlu0 %868
    %870 = vrot.lane.b32.xlu0 %v865, 32
    %v871 = vpop.permute.xlu0 %870
    %v874 = vadd.f32 %v106, %v869
    %v875 = vadd.f32 %v107, %v871
    %v876 = vmul.f32 %v874, %v874
    %v877 = vmul.f32 %v875, %v875
    %880 = vrot.lane.b32.xlu0 %v876, 96
    %v881 = vpop.permute.xlu0 %880
    %882 = vrot.lane.b32.xlu0 %v877, 96
    %v883 = vpop.permute.xlu0 %882
    %v886 = vsel %vm254, %v881, 0.0
    %887 = vadd.xlane.f32.xlu0 %v886
    %v888 = vpop.xlane.xlu0 %887
    %v889 = vsel %vm254, %v883, 0.0
    %890 = vadd.xlane.f32.xlu0 %v889
    %v891 = vpop.xlane.xlu0 %890
    %v892 = vmul.f32 %v888, %v413
    %v893 = vmul.f32 %v891, %v413
    %v894 = vadd.f32 %v892, 1e-06
    %v895 = vadd.f32 %v893, 1e-06
    %v896 = vrsqrt.pop %v894
    %v897 = vmul.f32 %v896, %v894
    %v898 = vmul.f32 %v897, %v896
    %v899 = vmul.f32 0.5, %v898
    %v900 = vsub.f32 1.5, %v899
    %v901 = vmul.f32 %v896, %v900
    %vm902 = vweird.f32 %v894
    %vm903 = vweird.f32 %v896
    %vm904 = vmor %vm902, %vm903
    %v905 = vsel %vm904, %v896, %v901
    %v906 = vrsqrt.pop %v895
    %v907 = vmul.f32 %v906, %v895
    %v908 = vmul.f32 %v907, %v906
    %v909 = vmul.f32 0.5, %v908
    %v910 = vsub.f32 1.5, %v909
    %v911 = vmul.f32 %v906, %v910
    %vm912 = vweird.f32 %v895
    %vm913 = vweird.f32 %v906
    %vm914 = vmor %vm912, %vm913
    %v915 = vsel %vm914, %v906, %v911
    %v916 = vmul.f32 %v874, %v905
    %v917 = vmul.f32 %v875, %v915
    %v918 = vpack.c.bf16 %v916, %v916
    %v919 = vpack.c.bf16 %v917, %v917
    %v922 = vunpack.c.l.b16 %v918
    %v923 = vunpack.c.l.b16 %v919
    %v924 = vpack.c.b16 %v923, %v922
    %925 = vrot.lane.b32.xlu0 %v924, 96
    %v926 = vpop.permute.xlu0 %925
    %927 = vrot.lane.b32.xlu0 %v924, 32
    %v928 = vpop.permute.xlu0 %927
    %929 = vrot.lane.b32.xlu0 %v924, 64
    %v930 = vpop.permute.xlu0 %929
    %v933 = vsel %vm254, %v926, %v924
    %v935 = vsel %vm456, %v933, %v928
    %v937 = vsel %vm459, %v935, %v930
    %v939 = vsel %vm480, %v937, 0
    %v940 = vsel %vm481, %v937, 0
    %v941 = vsel %vm482, %v937, 0
    %v942 = vsel %vm483, %v937, 0
    %v944 = vunpack.c.l.b16 %v271
    %v945 = vpack.c.b16 %v944, %v944
    %vm946 = vcmask 1043456
    %v949 = vsel %vm946, %v271, %v945
    %951 = vrot.lane.b32.xlu0 %v949, 32
    %v952 = vpop.permute.xlu0 %951
    %953 = vrot.lane.b32.xlu0 %v949, 64
    %v954 = vpop.permute.xlu0 %953
    %955 = vrot.lane.b32.xlu0 %v949, 96
    %v956 = vpop.permute.xlu0 %955
    %v958 = vsel %vm254, %v949, %v952
    %v960 = vsel %vm456, %v958, %v954
    %v962 = vsel %vm459, %v960, %v956
    %v964 = vshra.s32 %v273, 3
    %v965 = vshra.s32 %v274, 3
    %v966 = vshra.s32 %v275, 3
    %v967 = vshra.s32 %v276, 3
    %vm968 = vcmp.eq.s32.totalorder %v964, %v471
    %vm969 = vcmp.eq.s32.totalorder %v965, %v471
    %vm970 = vcmp.eq.s32.totalorder %v966, %v471
    %vm971 = vcmp.eq.s32.totalorder %v967, %v471
    %vm972 = vmpackc.low %vm969, %vm968
    %vm973 = vmpackc.low %vm971, %vm970
    %v974 = vsel %vm972, %v962, 0
    %v975 = vsel %vm973, %v962, 0
    %v992 = vunpack.c.l.b16 %v68
    %v993 = vunpack.c.l.b16 %v69
    %v994 = vunpack.c.l.b16 %v70
    %v995 = vunpack.c.l.b16 %v71
    %v996 = vunpack.c.l.b16 %v72
    %v997 = vunpack.c.l.b16 %v73
    %v998 = vunpack.c.l.b16 %v74
    %v999 = vunpack.c.l.b16 %v75
    %v1000 = vunpack.c.l.b16 %v76
    %v1001 = vunpack.c.l.b16 %v77
    %v1002 = vunpack.c.l.b16 %v78
    %v1003 = vunpack.c.l.b16 %v79
    %v1004 = vunpack.c.l.b16 %v80
    %v1005 = vunpack.c.l.b16 %v81
    %v1006 = vunpack.c.l.b16 %v82
    %v1007 = vunpack.c.l.b16 %v83
    %v1008 = vpack.c.b16 %v993, %v992
    %v1009 = vpack.c.b16 %v995, %v994
    %v1010 = vpack.c.b16 %v997, %v996
    %v1011 = vpack.c.b16 %v999, %v998
    %v1012 = vpack.c.b16 %v1001, %v1000
    %v1013 = vpack.c.b16 %v1003, %v1002
    %v1014 = vpack.c.b16 %v1005, %v1004
    %v1015 = vpack.c.b16 %v1007, %v1006
    %1024 = vmatpush.bf16.msra.mxu0 %v1015
    %1025 = vmatpush.bf16.msra.mxu0 %v1014
    %1026 = vmatpush.bf16.msra.mxu0 %v1013
    %1027 = vmatpush.bf16.msra.mxu0 %v1012
    %1028 = vmatpush.bf16.msra.mxu0 %v1011
    %1029 = vmatpush.bf16.msra.mxu0 %v1010
    %1030 = vmatpush.bf16.msra.mxu0 %v1009
    %1031 = vmatpush.bf16.msra.mxu0 %v1008
    %1032 = vmatmul.bf16.gmra.mxu0 %v939
    %v1033 = vpop.f32.mrf.mxu0
    %v1034 = vadd.f32 0.0, %v1033
    %v1035 = vpop.f32.mrf.mxu0
    %v1036 = vadd.f32 0.0, %v1035
    %1037 = vmatmul.bf16.gmra.mxu0 %v940
    %v1038 = vpop.f32.mrf.mxu0
    %v1039 = vadd.f32 0.0, %v1038
    %v1040 = vpop.f32.mrf.mxu0
    %v1041 = vadd.f32 0.0, %v1040
    %1042 = vmatmul.bf16.gmra.mxu0 %v941
    %v1043 = vpop.f32.mrf.mxu0
    %v1044 = vadd.f32 0.0, %v1043
    %v1045 = vpop.f32.mrf.mxu0
    %v1046 = vadd.f32 0.0, %v1045
    %1047 = vmatmul.bf16.gmra.mxu0 %v942
    %v1048 = vpop.f32.mrf.mxu0
    %v1049 = vadd.f32 0.0, %v1048
    %v1050 = vpop.f32.mrf.mxu0
    %v1051 = vadd.f32 0.0, %v1050
    %1052 = vmatmul.bf16.gmra.mxu0 %v974
    %v1053 = vpop.f32.mrf.mxu0
    %v1054 = vadd.f32 0.0, %v1053
    %v1055 = vpop.f32.mrf.mxu0
    %v1056 = vadd.f32 0.0, %v1055
    %1057 = vmatmul.bf16.gmra.mxu0 %v975
    %v1058 = vpop.f32.mrf.mxu0
    %v1059 = vadd.f32 0.0, %v1058
    %v1060 = vpop.f32.mrf.mxu0
    %v1061 = vadd.f32 0.0, %v1060
    %1062 = vdwg.mxu0
    %v1063 = vpack.c.bf16 %v1036, %v1034
    %v1064 = vpack.c.bf16 %v1041, %v1039
    %v1065 = vpack.c.bf16 %v1046, %v1044
    %v1066 = vpack.c.bf16 %v1051, %v1049
    %v1067 = vpack.c.bf16 %v1056, %v1054
    %v1068 = vpack.c.bf16 %v1061, %v1059
    %v1070 = vsel %vm254, %v1063, 0
    %v1073 = vsel %vm254, %v1064, 0
    %v1076 = vsel %vm254, %v1065, 0
    %v1079 = vsel %vm254, %v1066, 0
    %v1081 = vsel %vm254, %v271, 0
    %1083 = vmatpush.bf16.xpose.msra.mxu0 0
    %1084 = vmatpush.bf16.xpose.msra.mxu0 0
    %1085 = vmatpush.bf16.xpose.msra.mxu0 0
    %1086 = vmatpush.bf16.xpose.msra.mxu0 0
    %1087 = vmatpush.bf16.xpose.msra.mxu0 0
    %1088 = vmatpush.bf16.xpose.msra.mxu0 0
    %1089 = vmatpush.bf16.xpose.msra.mxu0 0
    %1090 = vmatpush.bf16.xpose.msra.mxu0 %v1081
    %1091 = vmatmul.bf16.gmra.mxu0 %v1070
    %v1092 = vpop.f32.mrf.mxu0
    %v1093 = vadd.f32 %v361, %v1092
    %v1094 = vpop.f32.mrf.mxu0
    %v1095 = vadd.f32 %v362, %v1094
    %1096 = vmatmul.bf16.gmra.mxu0 %v1073
    %v1097 = vpop.f32.mrf.mxu0
    %v1098 = vadd.f32 %v363, %v1097
    %v1099 = vpop.f32.mrf.mxu0
    %v1100 = vadd.f32 %v364, %v1099
    %1101 = vmatmul.bf16.gmra.mxu0 %v1076
    %v1102 = vpop.f32.mrf.mxu0
    %v1103 = vadd.f32 %v365, %v1102
    %v1104 = vpop.f32.mrf.mxu0
    %v1105 = vadd.f32 %v366, %v1104
    %1106 = vmatmul.bf16.gmra.mxu0 %v1079
    %v1107 = vpop.f32.mrf.mxu0
    %v1108 = vadd.f32 %v367, %v1107
    %v1109 = vpop.f32.mrf.mxu0
    %v1110 = vadd.f32 %v368, %v1109
    %1111 = vdwg.mxu0
    %vm1112 = vcmask 64512
    %v1113 = vsel %vm1112, %v1093, -inf
    %1114 = vmax.xlane.f32.xlu0 %v1113
    %v1115 = vpop.xlane.xlu0 %1114
    %v1116 = vsel %vm1112, %v1095, -inf
    %1117 = vmax.xlane.f32.xlu0 %v1116
    %v1118 = vpop.xlane.xlu0 %1117
    %v1119 = vsel %vm1112, %v1098, -inf
    %1120 = vmax.xlane.f32.xlu0 %v1119
    %v1121 = vpop.xlane.xlu0 %1120
    %v1122 = vsel %vm1112, %v1100, -inf
    %1123 = vmax.xlane.f32.xlu0 %v1122
    %v1124 = vpop.xlane.xlu0 %1123
    %v1125 = vsel %vm1112, %v1103, -inf
    %1126 = vmax.xlane.f32.xlu0 %v1125
    %v1127 = vpop.xlane.xlu0 %1126
    %v1128 = vsel %vm1112, %v1105, -inf
    %1129 = vmax.xlane.f32.xlu0 %v1128
    %v1130 = vpop.xlane.xlu0 %1129
    %v1131 = vsel %vm1112, %v1108, -inf
    %1132 = vmax.xlane.f32.xlu0 %v1131
    %v1133 = vpop.xlane.xlu0 %1132
    %v1134 = vsel %vm1112, %v1110, -inf
    %1135 = vmax.xlane.f32.xlu0 %v1134
    %v1136 = vpop.xlane.xlu0 %1135
    %v1137 = vsub.f32 %v1093, %v1115
    %v1138 = vsub.f32 %v1095, %v1118
    %v1139 = vsub.f32 %v1098, %v1121
    %v1140 = vsub.f32 %v1100, %v1124
    %v1141 = vsub.f32 %v1103, %v1127
    %v1142 = vsub.f32 %v1105, %v1130
    %v1143 = vsub.f32 %v1108, %v1133
    %v1144 = vsub.f32 %v1110, %v1136
    %v1145 = vmul.f32 %v1137, 1.442695
    %v1146 = vpow.pop %v1145
    %v1147 = vmul.f32 %v1138, 1.442695
    %v1148 = vpow.pop %v1147
    %v1149 = vmul.f32 %v1139, 1.442695
    %v1150 = vpow.pop %v1149
    %v1151 = vmul.f32 %v1140, 1.442695
    %v1152 = vpow.pop %v1151
    %v1153 = vmul.f32 %v1141, 1.442695
    %v1154 = vpow.pop %v1153
    %v1155 = vmul.f32 %v1142, 1.442695
    %v1156 = vpow.pop %v1155
    %v1157 = vmul.f32 %v1143, 1.442695
    %v1158 = vpow.pop %v1157
    %v1159 = vmul.f32 %v1144, 1.442695
    %v1160 = vpow.pop %v1159
    %v1161 = vsel %vm1112, %v1146, 0.0
    %1162 = vadd.xlane.f32.xlu0 %v1161
    %v1163 = vpop.xlane.xlu0 %1162
    %v1164 = vsel %vm1112, %v1148, 0.0
    %1165 = vadd.xlane.f32.xlu0 %v1164
    %v1166 = vpop.xlane.xlu0 %1165
    %v1167 = vsel %vm1112, %v1150, 0.0
    %1168 = vadd.xlane.f32.xlu0 %v1167
    %v1169 = vpop.xlane.xlu0 %1168
    %v1170 = vsel %vm1112, %v1152, 0.0
    %1171 = vadd.xlane.f32.xlu0 %v1170
    %v1172 = vpop.xlane.xlu0 %1171
    %v1173 = vsel %vm1112, %v1154, 0.0
    %1174 = vadd.xlane.f32.xlu0 %v1173
    %v1175 = vpop.xlane.xlu0 %1174
    %v1176 = vsel %vm1112, %v1156, 0.0
    %1177 = vadd.xlane.f32.xlu0 %v1176
    %v1178 = vpop.xlane.xlu0 %1177
    %v1179 = vsel %vm1112, %v1158, 0.0
    %1180 = vadd.xlane.f32.xlu0 %v1179
    %v1181 = vpop.xlane.xlu0 %1180
    %v1182 = vsel %vm1112, %v1160, 0.0
    %1183 = vadd.xlane.f32.xlu0 %v1182
    %v1184 = vpop.xlane.xlu0 %1183
    %v1185 = vrcp.pop %v1163
    %v1186 = vrcp.pop %v1166
    %v1187 = vrcp.pop %v1169
    %v1188 = vrcp.pop %v1172
    %v1189 = vrcp.pop %v1175
    %v1190 = vrcp.pop %v1178
    %v1191 = vrcp.pop %v1181
    %v1192 = vrcp.pop %v1184
    %v1193 = vmul.f32 %v1146, %v1185
    %v1194 = vmul.f32 %v1148, %v1186
    %v1195 = vmul.f32 %v1150, %v1187
    %v1196 = vmul.f32 %v1152, %v1188
    %v1197 = vmul.f32 %v1154, %v1189
    %v1198 = vmul.f32 %v1156, %v1190
    %v1199 = vmul.f32 %v1158, %v1191
    %v1200 = vmul.f32 %v1160, %v1192
    %v1201 = vpack.c.bf16 %v1193, %v1193
    %v1202 = vpack.c.bf16 %v1194, %v1194
    %v1203 = vpack.c.bf16 %v1195, %v1195
    %v1204 = vpack.c.bf16 %v1196, %v1196
    %v1205 = vpack.c.bf16 %v1197, %v1197
    %v1206 = vpack.c.bf16 %v1198, %v1198
    %v1207 = vpack.c.bf16 %v1199, %v1199
    %v1208 = vpack.c.bf16 %v1200, %v1200
    %v1217 = vunpack.c.l.b16 %v1201
    %v1218 = vunpack.c.l.b16 %v1202
    %v1219 = vunpack.c.l.b16 %v1203
    %v1220 = vunpack.c.l.b16 %v1204
    %v1221 = vunpack.c.l.b16 %v1205
    %v1222 = vunpack.c.l.b16 %v1206
    %v1223 = vunpack.c.l.b16 %v1207
    %v1224 = vunpack.c.l.b16 %v1208
    %v1225 = vpack.c.b16 %v1218, %v1217
    %v1226 = vpack.c.b16 %v1220, %v1219
    %v1227 = vpack.c.b16 %v1222, %v1221
    %v1228 = vpack.c.b16 %v1224, %v1223
    %1229 = vrot.lane.b32.xlu0 %v1225, 8
    %v1230 = vpop.permute.xlu0 %1229
    %1231 = vrot.lane.b32.xlu0 %v1226, 8
    %v1232 = vpop.permute.xlu0 %1231
    %1233 = vrot.lane.b32.xlu0 %v1227, 8
    %v1234 = vpop.permute.xlu0 %1233
    %1235 = vrot.lane.b32.xlu0 %v1228, 8
    %v1236 = vpop.permute.xlu0 %1235
    %1237 = vrot.lane.b32.xlu0 %v1225, 16
    %v1238 = vpop.permute.xlu0 %1237
    %1239 = vrot.lane.b32.xlu0 %v1226, 16
    %v1240 = vpop.permute.xlu0 %1239
    %1241 = vrot.lane.b32.xlu0 %v1227, 16
    %v1242 = vpop.permute.xlu0 %1241
    %1243 = vrot.lane.b32.xlu0 %v1228, 16
    %v1244 = vpop.permute.xlu0 %1243
    %1245 = vrot.lane.b32.xlu0 %v1225, 24
    %v1246 = vpop.permute.xlu0 %1245
    %1247 = vrot.lane.b32.xlu0 %v1226, 24
    %v1248 = vpop.permute.xlu0 %1247
    %1249 = vrot.lane.b32.xlu0 %v1227, 24
    %v1250 = vpop.permute.xlu0 %1249
    %1251 = vrot.lane.b32.xlu0 %v1228, 24
    %v1252 = vpop.permute.xlu0 %1251
    %v1255 = vsel %vm1112, %v1225, %v1230
    %v1258 = vsel %vm1112, %v1226, %v1232
    %v1261 = vsel %vm1112, %v1227, %v1234
    %v1264 = vsel %vm1112, %v1228, %v1236
    %v1266 = vsel %vm612, %v1255, %v1238
    %v1268 = vsel %vm612, %v1258, %v1240
    %v1270 = vsel %vm612, %v1261, %v1242
    %v1272 = vsel %vm612, %v1264, %v1244
    %vm1273 = vcmask 195584
    %v1275 = vsel %vm1273, %v1266, %v1246
    %v1278 = vsel %vm1273, %v1268, %v1248
    %v1281 = vsel %vm1273, %v1270, %v1250
    %v1284 = vsel %vm1273, %v1272, %v1252
    %vm1286 = vcmp.eq.s32.totalorder %v463, %v299
    %vm1287 = vcmp.eq.s32.totalorder %v464, %v299
    %vm1288 = vcmp.eq.s32.totalorder %v465, %v299
    %vm1289 = vcmp.eq.s32.totalorder %v466, %v299
    %vm1290 = vcmp.eq.s32.totalorder %v467, %v299
    %vm1291 = vcmp.eq.s32.totalorder %v468, %v299
    %vm1292 = vcmp.eq.s32.totalorder %v469, %v299
    %vm1293 = vcmp.eq.s32.totalorder %v470, %v299
    %vm1294 = vmpackc.low %vm1287, %vm1286
    %vm1295 = vmpackc.low %vm1289, %vm1288
    %vm1296 = vmpackc.low %vm1291, %vm1290
    %vm1297 = vmpackc.low %vm1293, %vm1292
    %v1298 = vsel %vm1294, %v1275, 0
    %v1299 = vsel %vm1295, %v1278, 0
    %v1300 = vsel %vm1296, %v1281, 0
    %v1301 = vsel %vm1297, %v1284, 0
    %1304 = vrot.lane.b32.xlu0 %v1067, 96
    %v1305 = vpop.permute.xlu0 %1304
    %1306 = vrot.lane.b32.xlu0 %v1068, 96
    %v1307 = vpop.permute.xlu0 %1306
    %v1311 = vsel %vm254, %v1298, 0
    %v1314 = vsel %vm254, %v1299, 0
    %v1317 = vsel %vm254, %v1300, 0
    %v1320 = vsel %vm254, %v1301, 0
    %1322 = vmatpush.bf16.msra.mxu0 0
    %1323 = vmatpush.bf16.msra.mxu0 0
    %1324 = vmatpush.bf16.msra.mxu0 0
    %1325 = vmatpush.bf16.msra.mxu0 0
    %1326 = vmatpush.bf16.msra.mxu0 0
    %1327 = vmatpush.bf16.msra.mxu0 0
    %1328 = vmatpush.bf16.msra.mxu0 %v1307
    %1329 = vmatpush.bf16.msra.mxu0 %v1305
    %1330 = vmatmul.bf16.gmra.mxu0 %v1311
    %v1331 = vpop.f32.mrf.mxu0
    %v1332 = vadd.f32 0.0, %v1331
    %v1333 = vpop.f32.mrf.mxu0
    %v1334 = vadd.f32 0.0, %v1333
    %1335 = vmatmul.bf16.gmra.mxu0 %v1314
    %v1336 = vpop.f32.mrf.mxu0
    %v1337 = vadd.f32 0.0, %v1336
    %v1338 = vpop.f32.mrf.mxu0
    %v1339 = vadd.f32 0.0, %v1338
    %1340 = vmatmul.bf16.gmra.mxu0 %v1317
    %v1341 = vpop.f32.mrf.mxu0
    %v1342 = vadd.f32 0.0, %v1341
    %v1343 = vpop.f32.mrf.mxu0
    %v1344 = vadd.f32 0.0, %v1343
    %1345 = vmatmul.bf16.gmra.mxu0 %v1320
    %v1346 = vpop.f32.mrf.mxu0
    %v1347 = vadd.f32 0.0, %v1346
    %v1348 = vpop.f32.mrf.mxu0
    %v1349 = vadd.f32 0.0, %v1348
    %1350 = vdwg.mxu0
    %v1351 = vadd.f32 %v1332, %v1337
    %v1352 = vadd.f32 %v1334, %v1339
    %v1353 = vadd.f32 %v1351, %v1342
    %v1354 = vadd.f32 %v1352, %v1344
    %v1355 = vadd.f32 %v1353, %v1347
    %v1356 = vadd.f32 %v1354, %v1349
    %1358 = vset.pattern.permute.xlu0 1
    %1359 = vperm.xlu0 %1358, %v389
    %v1360 = vpop.permute.xlu0 %1359
    %1363 = vset.pattern.permute.xlu0 1
    %1364 = vperm.xlu0 %1363, %v390
    %v1365 = vpop.permute.xlu0 %1364
    %v1367 = vmul.f32 %v1355, %v1360
    %v1368 = vmul.f32 %v1356, %v1365
    %1371 = vrot.lane.b32.xlu0 %v1367, 32
    %v1372 = vpop.permute.xlu0 %1371
    %1373 = vrot.lane.b32.xlu0 %v1368, 32
    %v1374 = vpop.permute.xlu0 %1373
    %v1377 = vadd.f32 %v874, %v1372
    %v1378 = vadd.f32 %v875, %v1374
    %v1379 = vmul.f32 %v1377, %v1377
    %v1380 = vmul.f32 %v1378, %v1378
    %1383 = vrot.lane.b32.xlu0 %v1379, 96
    %v1384 = vpop.permute.xlu0 %1383
    %1385 = vrot.lane.b32.xlu0 %v1380, 96
    %v1386 = vpop.permute.xlu0 %1385
    %v1389 = vsel %vm254, %v1384, 0.0
    %1390 = vadd.xlane.f32.xlu0 %v1389
    %v1391 = vpop.xlane.xlu0 %1390
    %v1392 = vsel %vm254, %v1386, 0.0
    %1393 = vadd.xlane.f32.xlu0 %v1392
    %v1394 = vpop.xlane.xlu0 %1393
    %v1395 = vmul.f32 %v1391, %v413
    %v1396 = vmul.f32 %v1394, %v413
    %v1397 = vadd.f32 %v1395, 1e-06
    %v1398 = vadd.f32 %v1396, 1e-06
    %v1399 = vrsqrt.pop %v1397
    %v1400 = vmul.f32 %v1399, %v1397
    %v1401 = vmul.f32 %v1400, %v1399
    %v1402 = vmul.f32 0.5, %v1401
    %v1403 = vsub.f32 1.5, %v1402
    %v1404 = vmul.f32 %v1399, %v1403
    %vm1405 = vweird.f32 %v1397
    %vm1406 = vweird.f32 %v1399
    %vm1407 = vmor %vm1405, %vm1406
    %v1408 = vsel %vm1407, %v1399, %v1404
    %v1409 = vrsqrt.pop %v1398
    %v1410 = vmul.f32 %v1409, %v1398
    %v1411 = vmul.f32 %v1410, %v1409
    %v1412 = vmul.f32 0.5, %v1411
    %v1413 = vsub.f32 1.5, %v1412
    %v1414 = vmul.f32 %v1409, %v1413
    %vm1415 = vweird.f32 %v1398
    %vm1416 = vweird.f32 %v1409
    %vm1417 = vmor %vm1415, %vm1416
    %v1418 = vsel %vm1417, %v1409, %v1414
    %v1419 = vmul.f32 %v1377, %v1408
    %v1420 = vmul.f32 %v1378, %v1418
    %v1421 = vpack.c.bf16 %v1420, %v1419
    %1423 = vrot.lane.b32.xlu0 %v1421, 96
    %v1424 = vpop.permute.xlu0 %1423
    %v1429 = vunpack.c.l.b16 %v84
    %v1430 = vunpack.c.l.b16 %v85
    %v1431 = vunpack.c.l.b16 %v86
    %v1432 = vunpack.c.l.b16 %v87
    %v1433 = vpack.c.b16 %v1430, %v1429
    %v1434 = vpack.c.b16 %v1432, %v1431
    %v1438 = vsel %vm254, %v1424, 0
    %1440 = vmatpush.bf16.msra.mxu0 0
    %1441 = vmatpush.bf16.msra.mxu0 0
    %1442 = vmatpush.bf16.msra.mxu0 0
    %1443 = vmatpush.bf16.msra.mxu0 0
    %1444 = vmatpush.bf16.msra.mxu0 0
    %1445 = vmatpush.bf16.msra.mxu0 0
    %1446 = vmatpush.bf16.msra.mxu0 %v1434
    %1447 = vmatpush.bf16.msra.mxu0 %v1433
    %1448 = vmatmul.bf16.gmra.mxu0 %v1438
    %v1449 = vpop.f32.mrf.mxu0
    %v1450 = vadd.f32 0.0, %v1449
    %v1451 = vpop.f32.mrf.mxu0
    %v1452 = vadd.f32 0.0, %v1451
    %1453 = vdwg.mxu0
    %v1454 = vmul.f32 %v1450, %v1450
    %v1455 = vmul.f32 %v1452, %v1452
    %v1456 = vmul.f32 %v1450, %v1454
    %v1457 = vmul.f32 %v1452, %v1455
    %v1458 = vmul.f32 %v1456, 0.044715
    %v1459 = vmul.f32 %v1457, 0.044715
    %v1460 = vadd.f32 %v1450, %v1458
    %v1461 = vadd.f32 %v1452, %v1459
    %v1462 = vmul.f32 %v1460, 0.7978846
    %v1463 = vmul.f32 %v1461, 0.7978846
    %v1464 = vtanh.pop %v1462
    %v1465 = vtanh.pop %v1463
    %v1466 = vadd.f32 %v1464, 1.0
    %v1467 = vadd.f32 %v1465, 1.0
    %v1468 = vmul.f32 %v1466, 0.5
    %v1469 = vmul.f32 %v1467, 0.5
    %v1470 = vmul.f32 %v1450, %v1468
    %v1471 = vmul.f32 %v1452, %v1469
    %v1472 = vpack.c.bf16 %v1471, %v1470
    %v1481 = vunpack.c.l.b16 %v88
    %v1482 = vunpack.c.l.b16 %v89
    %v1483 = vunpack.c.l.b16 %v90
    %v1484 = vunpack.c.l.b16 %v91
    %v1485 = vunpack.c.l.b16 %v92
    %v1486 = vunpack.c.l.b16 %v93
    %v1487 = vunpack.c.l.b16 %v94
    %v1488 = vunpack.c.l.b16 %v95
    %v1489 = vpack.c.b16 %v1482, %v1481
    %v1490 = vpack.c.b16 %v1484, %v1483
    %v1491 = vpack.c.b16 %v1486, %v1485
    %v1492 = vpack.c.b16 %v1488, %v1487
    %v1498 = vsel %vm456, %v1472, 0
    %1500 = vmatpush.bf16.msra.mxu0 0
    %1501 = vmatpush.bf16.msra.mxu0 0
    %1502 = vmatpush.bf16.msra.mxu0 0
    %1503 = vmatpush.bf16.msra.mxu0 0
    %1504 = vmatpush.bf16.msra.mxu0 %v1492
    %1505 = vmatpush.bf16.msra.mxu0 %v1491
    %1506 = vmatpush.bf16.msra.mxu0 %v1490
    %1507 = vmatpush.bf16.msra.mxu0 %v1489
    %1508 = vmatmul.bf16.gmra.mxu0 %v1498
    %v1509 = vpop.f32.mrf.mxu0
    %v1510 = vadd.f32 0.0, %v1509
    %v1511 = vpop.f32.mrf.mxu0
    %v1512 = vadd.f32 0.0, %v1511
    %1513 = vdwg.mxu0
    %1516 = vrot.lane.b32.xlu0 %v1510, 32
    %v1517 = vpop.permute.xlu0 %1516
    %1518 = vrot.lane.b32.xlu0 %v1512, 32
    %v1519 = vpop.permute.xlu0 %1518
    %v1522 = vadd.f32 %v1377, %v1517
    %v1523 = vadd.f32 %v1378, %v1519
    %v1524 = vmul.f32 %v1522, %v1522
    %v1525 = vmul.f32 %v1523, %v1523
    %1528 = vrot.lane.b32.xlu0 %v1524, 96
    %v1529 = vpop.permute.xlu0 %1528
    %1530 = vrot.lane.b32.xlu0 %v1525, 96
    %v1531 = vpop.permute.xlu0 %1530
    %v1534 = vsel %vm254, %v1529, 0.0
    %1535 = vadd.xlane.f32.xlu0 %v1534
    %v1536 = vpop.xlane.xlu0 %1535
    %v1537 = vsel %vm254, %v1531, 0.0
    %1538 = vadd.xlane.f32.xlu0 %v1537
    %v1539 = vpop.xlane.xlu0 %1538
    %v1540 = vmul.f32 %v1536, %v413
    %v1541 = vmul.f32 %v1539, %v413
    %v1542 = vadd.f32 %v1540, 1e-06
    %v1543 = vadd.f32 %v1541, 1e-06
    %v1544 = vrsqrt.pop %v1542
    %v1545 = vmul.f32 %v1544, %v1542
    %v1546 = vmul.f32 %v1545, %v1544
    %v1547 = vmul.f32 0.5, %v1546
    %v1548 = vsub.f32 1.5, %v1547
    %v1549 = vmul.f32 %v1544, %v1548
    %vm1550 = vweird.f32 %v1542
    %vm1551 = vweird.f32 %v1544
    %vm1552 = vmor %vm1550, %vm1551
    %v1553 = vsel %vm1552, %v1544, %v1549
    %v1554 = vrsqrt.pop %v1543
    %v1555 = vmul.f32 %v1554, %v1543
    %v1556 = vmul.f32 %v1555, %v1554
    %v1557 = vmul.f32 0.5, %v1556
    %v1558 = vsub.f32 1.5, %v1557
    %v1559 = vmul.f32 %v1554, %v1558
    %vm1560 = vweird.f32 %v1543
    %vm1561 = vweird.f32 %v1554
    %vm1562 = vmor %vm1560, %vm1561
    %v1563 = vsel %vm1562, %v1554, %v1559
    %v1564 = vmul.f32 %v1522, %v1553
    %v1565 = vmul.f32 %v1523, %v1563
    %v1566 = vpack.c.bf16 %v1565, %v1564
    %1568 = vrot.lane.b32.xlu0 %v1566, 96
    %v1569 = vpop.permute.xlu0 %1568
    %v1574 = vunpack.c.l.b16 %v96
    %v1575 = vunpack.c.l.b16 %v97
    %v1576 = vunpack.c.l.b16 %v98
    %v1577 = vunpack.c.l.b16 %v99
    %v1578 = vpack.c.b16 %v1575, %v1574
    %v1579 = vpack.c.b16 %v1577, %v1576
    %v1583 = vsel %vm254, %v1569, 0
    %1585 = vmatpush.bf16.msra.mxu0 0
    %1586 = vmatpush.bf16.msra.mxu0 0
    %1587 = vmatpush.bf16.msra.mxu0 0
    %1588 = vmatpush.bf16.msra.mxu0 0
    %1589 = vmatpush.bf16.msra.mxu0 0
    %1590 = vmatpush.bf16.msra.mxu0 0
    %1591 = vmatpush.bf16.msra.mxu0 %v1579
    %1592 = vmatpush.bf16.msra.mxu0 %v1578
    %1593 = vmatmul.bf16.gmra.mxu0 %v1583
    %v1594 = vpop.f32.mrf.mxu0
    %v1595 = vadd.f32 0.0, %v1594
    %v1596 = vpop.f32.mrf.mxu0
    %v1597 = vadd.f32 0.0, %v1596
    %1598 = vdwg.mxu0
    %1599 = vst [vmem:[#allocation2] sm:$0xff] %v1595
    %1600 = vst [vmem:[#allocation2 + $0x8] sm:$0xff] %v1597
    %vm1601 = vcmp.ne.f32.partialorder %v106, -100.0
    %vm1602 = vcmp.ne.f32.partialorder %v107, -100.0
    %v1603 = vsel %vm1601, %v106, 0.0
    %v1604 = vsel %vm1602, %v107, 0.0
    %v1605 = vcvt.f32.s32.to.zero.pseudo %v1603
    %v1606 = vcvt.f32.s32.to.zero.pseudo %v1604
    %1607 = vmax.xlane.f32.xlu0 %v1595
    %v1608 = vpop.xlane.xlu0 %1607
    %1609 = vmax.xlane.f32.xlu0 %v1597
    %v1610 = vpop.xlane.xlu0 %1609
    %v1611 = vsub.f32 %v1595, %v1608
    %v1612 = vsub.f32 %v1597, %v1610
    %v1613 = vmul.f32 %v1611, 1.442695
    %v1614 = vpow.pop %v1613
    %v1615 = vmul.f32 %v1612, 1.442695
    %v1616 = vpow.pop %v1615
    %1617 = vadd.xlane.f32.xlu0 %v1614
    %v1618 = vpop.xlane.xlu0 %1617
    %1619 = vadd.xlane.f32.xlu0 %v1616
    %v1620 = vpop.xlane.xlu0 %1619
    %v1621 = vlog2.pop %v1618
    %v1622 = vmul.f32 %v1621, 0.6931472
    %v1623 = vlog2.pop %v1620
    %v1624 = vmul.f32 %v1623, 0.6931472
    %v1625 = vadd.f32 %v1608, %v1622
    %v1626 = vadd.f32 %v1610, %v1624
    %1627 = vset.pattern.permute.xlu0 2
    %1628 = vperm.xlu0 %1627, %v1605
    %v1629 = vpop.permute.xlu0 %1628
    %1630 = vset.pattern.permute.xlu0 2
    %1631 = vperm.xlu0 %1630, %v1606
    %v1632 = vpop.permute.xlu0 %1631
    %vm1633 = vcmp.eq.s32.totalorder %v282, %v1629
    %vm1634 = vcmp.eq.s32.totalorder %v282, %v1632
    %v1635 = vsel %vm1633, %v1595, 0.0
    %v1636 = vsel %vm1634, %v1597, 0.0
    %1637 = vadd.xlane.f32.xlu0 %v1635
    %v1638 = vpop.xlane.xlu0 %1637
    %1639 = vadd.xlane.f32.xlu0 %v1636
    %v1640 = vpop.xlane.xlu0 %1639
    %v1641 = vsel %vm1601, 1, 0
    %v1642 = vsel %vm1602, 1, 0
    %v1643 = vcvt.s32.f32 %v1641
    %v1644 = vcvt.s32.f32 %v1642
    %v1645 = vsub.f32 %v1625, %v1638
    %v1646 = vsub.f32 %v1626, %v1640
    %v1647 = vmul.f32 %v1645, %v1643
    %v1648 = vmul.f32 %v1646, %v1644
    %vm1649 = vcmask 23568
    %v1650 = vsel %vm1649, %v1647, 0.0
    %v1651 = vsel %vm1649, %v1648, 0.0
    %v1652 = vadd.f32 %v1650, %v1651
    %v1653 = vrot.slane %v1652, 4
    %v1654 = vadd.f32 %v1652, %v1653
    %v1655 = vrot.slane %v1654, 2
    %v1656 = vadd.f32 %v1654, %v1655
    %v1657 = vrot.slane %v1656, 1
    %v1658 = vadd.f32 %v1656, %v1657
    %v1659 = vsel %vm1649, %v1643, 0.0
    %v1660 = vsel %vm1649, %v1644, 0.0
    %v1661 = vadd.f32 %v1659, %v1660
    %v1662 = vrot.slane %v1661, 4
    %v1663 = vadd.f32 %v1661, %v1662
    %v1664 = vrot.slane %v1663, 2
    %v1665 = vadd.f32 %v1663, %v1664
    %v1666 = vrot.slane %v1665, 1
    %v1667 = vadd.f32 %v1665, %v1666
    %v1668 = vmax.f32 %v1667, 1.0
    %v1669 = vrcp.pop %v1668
    %v1670 = vmul.f32 %v1668, %v1669
    %v1671 = vsub.f32 1.0, %v1670
    %v1672 = vmul.f32 %v1669, %v1671
    %v1673 = vadd.f32 %v1669, %v1672
    %vm1674 = vweird.f32 %v1668
    %vm1675 = vweird.f32 %v1669
    %vm1676 = vmor %vm1674, %vm1675
    %v1677 = vsel %vm1676, %v1669, %v1673
    %v1678 = vand.u32 2147483647, %v1668
    %vm1679 = vcmp.eq.f32.partialorder %v1678, 8.507059e+37
    %v1680 = vand.u32 %v1668, 2147483648
    %v1681 = vor.u32 1.1754944e-38, %v1680
    %v1682 = vsel %vm1679, %v1681, %v1677
    %v1683 = vmul.f32 %v1658, %v1682
    %1685 = vrot.lane.b32.xlu0 %v1683, 126
    %v1686 = vpop.permute.xlu0 %1685
    %vm1688 = vcmask 0
    %1689 = vst.msk [vmem:[#allocation4] sm:$0x1] %vm1688, %v1686
    // Predicated region
    $region10: #{evaluator_forward.1} parent=1 // pred_check
      _
    $region11: #{evaluator_forward.1} parent=1 // pred_check_branch
      %1691 = sbr.rel (0) target = $region13
    $region12: #{evaluator_forward.1} parent=1 // pred_region
      %1693 = vsyncadd [#allocation3], 0
      %s1694 = sshll.u32 [#allocation2], 4
      %s1695 = int_to_ptr.vmem [resolvable:$true] %s1694
      %s1696 = sshll.u32 %s2, 4
      %s1697 = int_to_ptr.hbm [resolvable:$true] %s1696
      %1702 = dma.vmem_to_hbm [thread:$0]  %s1695, 256, %s1697, [#allocation3], 128, 128, 8
    $region13: #{evaluator_forward.1} parent=1 // pred_fallthru
      _
    // Predicated region
    $region14: #{evaluator_forward.1} parent=1 // pred_check
      _
    $region15: #{evaluator_forward.1} parent=1 // pred_check_branch
      %1704 = sbr.rel (0) target = $region17
    $region16: #{evaluator_forward.1} parent=1 // pred_region
      %1706 = vsyncadd [#allocation5], 0
      %s1708 = sshll.u32 [#allocation4], 4
      %s1709 = int_to_ptr.vmem [resolvable:$true] %s1708
      %s1710 = sshll.u32 %s3, 4
      %s1711 = int_to_ptr.hbm [resolvable:$true] %s1710
      %1713 = dma.vmem_to_hbm [thread:$0]  %s1709, 16, %s1711, [#allocation5]
    $region17: #{evaluator_forward.1} parent=1 // pred_fallthru
      _
    // Predicated region
    $region18: #{evaluator_forward.1} parent=1 // pred_check
      _
    $region19: #{evaluator_forward.1} parent=1 // pred_check_branch
      %1715 = sbr.rel (0) target = $region21
    $region20: #{evaluator_forward.1} parent=1 // pred_region
      %1717 = dma.done [#allocation3], 256
    $region21: #{evaluator_forward.1} parent=1 // pred_fallthru
      _
    // Predicated region
    $region22: #{evaluator_forward.1} parent=1 // pred_check
      _
    $region23: #{evaluator_forward.1} parent=1 // pred_check_branch
      %1719 = sbr.rel (0) target = $region25
    $region24: #{evaluator_forward.1} parent=1 // pred_region
      %1721 = dma.done [#allocation5], 16
    $region25: #{evaluator_forward.1} parent=1 // pred_fallthru
      _
    %1722 = vsyncpa [#allocation3], 1
    %1723 = vsyncpa [#allocation5], 1

</llo_original>
